<compile_context>
chip_gen: v7x
topology: tpu7x:2x2x1
jax: 0.10.0
libtpu: 0.0.40
codegen_flags: <defaults>
</compile_context>

<pallas_src>
import functools

import jax
import jax.numpy as jnp
from jax import lax
from jax.experimental import pallas as pl
from jax.experimental.pallas import tpu as pltpu

EPS = 1e-5


def _resnet_block_kernel(bt, x_ref, m_ref, w1_ref, w2_ref, p1_ref, p2_ref,
                         gm1_ref, gm2_ref, o_ref):
    Cin = x_ref.shape[1]
    Cout = o_ref.shape[1]
    L = x_ref.shape[2]

    # Grid-invariant parameters: load once per grid step (no redundant casts).
    w1 = w1_ref[...]            # (Cin+Cout, 3*Cin) bf16  rows = [conv1 taps ; 0|w_sc|0]
    w2 = w2_ref[...]            # (Cout, 3*Cin)     bf16
    p1 = p1_ref[...]            # (Cin, 3)  f32: [bias, gamma, beta]
    p2 = p2_ref[...]            # (Cout, 3) f32
    b1, g1, be1 = p1[:, 0:1], p1[:, 1:2], p1[:, 2:3]
    b2, g2, be2 = p2[:, 0:1], p2[:, 1:2], p2[:, 2:3]
    gm1 = gm1_ref[...]          # (Cin, Cin)  group-average matrix, scaled 1/(gs*L)
    gm2 = gm2_ref[...]          # (Cout, Cout)

    # Lane iota + edge masks: built once, shared by both convs.
    col = lax.broadcasted_iota(jnp.int32, (Cin, L), 1)
    is_first = col == 0
    is_last = col == (L - 1)

    def shift_cat_bf16(v):
        # v: (Cin, L) f32  ->  [v_{l-1}; v_l; v_{l+1}] stacked: (3*Cin, L) bf16.
        # 'same' zero padding via roll (non-negative shifts only) + edge masking.
        v_prev = jnp.where(is_first, 0.0, pltpu.roll(v, shift=1, axis=1))
        v_next = jnp.where(is_last, 0.0, pltpu.roll(v, shift=L - 1, axis=1))
        return jnp.concatenate([v_prev, v, v_next], axis=0).astype(jnp.bfloat16)

    def group_norm(y, gmat, gamma, beta):
        # y: (C, L) f32.  Lane-reduce first, then aggregate the tiny per-channel
        # stats per group with a small matmul (keeps y in native (8,128) layout).
        s = jnp.sum(y, axis=1, keepdims=True)            # (C, 1)
        ss = jnp.sum(y * y, axis=1, keepdims=True)       # (C, 1)
        stats = jnp.dot(gmat, jnp.concatenate([s, ss], axis=1),
                        preferred_element_type=jnp.float32)   # (C, 2): [mean, E[y^2]]
        mean = stats[:, 0:1]
        var = stats[:, 1:2] - mean * mean
        scale = gamma * lax.rsqrt(var + EPS)
        shift = beta - mean * scale
        return y * scale + shift

    for b in range(bt):                     # bt is static & small -> unrolled
        x = x_ref[b]                        # (Cin, L) f32
        m = m_ref[b]                        # (1, L)   f32 (0/1)

        # block-1 conv (k=3) and 1x1 shortcut fused into one MXU matmul.
        y = jnp.dot(w1, shift_cat_bf16(x), preferred_element_type=jnp.float32)
        h = y[:Cin] + b1                    # conv1 output + bias  (Cin, L)
        residual = y[Cin:]                  # shortcut output      (Cout, L)

        h = group_norm(h, gm1, g1, be1)
        h = jnp.maximum(h * m, 0.0)         # mask then ReLU (== ReLU then mask)

        # block-2 conv (k=3): one matmul.
        h2 = jnp.dot(w2, shift_cat_bf16(h), preferred_element_type=jnp.float32) + b2
        h2 = group_norm(h2, gm2, g2, be2)

        # residual*m + h2*m == (residual + h2)*m; ReLU commutes with a 0/1 mask,
        # so a single trailing mask multiply suffices.
        o_ref[b] = (jnp.maximum(residual + h2, 0.0) * m).astype(o_ref.dtype)


def shallow_resnet_block_1d(x, mask, params, *, groups):
    """x: (B, Cin, L) f32, mask: (B, 1, L) bool, params in PyTorch layout."""
    B, Cin, L = x.shape
    Cout = params["w_sc"].shape[0]
    assert Cin % groups == 0 and Cout % groups == 0

    # ---- pre-pack weights once in the wrapper (outside the kernel) ----
    w1 = params["w1"]            # (Cin, Cin, 3)   (out, in, k)
    w2 = params["w2"]            # (Cout, Cin, 3)
    wsc = params["w_sc"]         # (Cout, Cin)

    w1_cat = jnp.concatenate([w1[:, :, 0], w1[:, :, 1], w1[:, :, 2]], axis=1)
    wsc_cat = jnp.concatenate(
        [jnp.zeros((Cout, Cin), w1.dtype), wsc, jnp.zeros((Cout, Cin), w1.dtype)],
        axis=1)
    w_big1 = jnp.concatenate([w1_cat, wsc_cat], axis=0).astype(jnp.bfloat16)
    w_cat2 = jnp.concatenate([w2[:, :, 0], w2[:, :, 1], w2[:, :, 2]],
                             axis=1).astype(jnp.bfloat16)

    p1 = jnp.stack([params["b1"], params["g1"], params["be1"]],
                   axis=1).astype(jnp.float32)      # (Cin, 3)
    p2 = jnp.stack([params["b2"], params["g2"], params["be2"]],
                   axis=1).astype(jnp.float32)      # (Cout, 3)

    def group_avg_matrix(C):
        gs = C // groups
        gid = jnp.arange(C, dtype=jnp.int32) // gs
        mat = (gid[:, None] == gid[None, :]).astype(jnp.float32)
        return mat / float(gs * L)

    gm1 = group_avg_matrix(Cin)
    gm2 = group_avg_matrix(Cout)

    mask_f = mask.astype(jnp.float32)

    # ---- batch tiling: keep >= 2 (even) grid steps for v7x's 2 TensorCores,
    #      process several samples per step when B is larger (amortize overhead).
    if B > 2 and B % 2 == 0:
        bt = min(B // 2, 8)
        while B % bt != 0:
            bt -= 1
    else:
        bt = 1
    grid = (B // bt,)

    const = lambda i: (0, 0)
    kernel = functools.partial(_resnet_block_kernel, bt)

    return pl.pallas_call(
        kernel,
        out_shape=jax.ShapeDtypeStruct((B, Cout, L), x.dtype),
        grid=grid,
        in_specs=[
            pl.BlockSpec((bt, Cin, L), lambda i: (i, 0, 0)),     # x
            pl.BlockSpec((bt, 1, L), lambda i: (i, 0, 0)),       # mask
            pl.BlockSpec((Cin + Cout, 3 * Cin), const),          # fused conv1 + shortcut W
            pl.BlockSpec((Cout, 3 * Cin), const),                # fused conv2 W
            pl.BlockSpec((Cin, 3), const),                       # [b1, g1, be1]
            pl.BlockSpec((Cout, 3), const),                      # [b2, g2, be2]
            pl.BlockSpec((Cin, Cin), const),                     # group-avg matrix 1
            pl.BlockSpec((Cout, Cout), const),                   # group-avg matrix 2
        ],
        out_specs=pl.BlockSpec((bt, Cout, L), lambda i: (i, 0, 0)),
        compiler_params=pltpu.CompilerParams(
            dimension_semantics=("parallel",)),
    )(x, mask_f, w_big1, w_cat2, p1, p2, gm1, gm2)


# ---------------- pure-JAX reference (mirrors the PyTorch module) ----------------

def _ref_conv1d(x, w, b, pad):
    # x: (B, Cin, L), w: (Cout, Cin, K)
    y = lax.conv_general_dilated(
        x, w, window_strides=(1,), padding=[(pad, pad)],
        dimension_numbers=("NCH", "OIH", "NCH"),
        precision=lax.Precision.HIGHEST)
    if b is not None:
        y = y + b[None, :, None]
    return y


def _ref_group_norm(x, gamma, beta, groups):
    B, C, L = x.shape
    xr = x.reshape(B, groups, C // groups, L)
    mean = jnp.mean(xr, axis=(2, 3), keepdims=True)
    var = jnp.mean(jnp.square(xr - mean), axis=(2, 3), keepdims=True)
    xn = ((xr - mean) * lax.rsqrt(var + EPS)).reshape(B, C, L)
    return xn * gamma[None, :, None] + beta[None, :, None]


def reference(x, mask, p, *, groups):
    m = mask.astype(x.dtype)
    residual = _ref_conv1d(x, p["w_sc"][:, :, None], None, 0) * m
    h = _ref_conv1d(x, p["w1"], p["b1"], 1)
    h = _ref_group_norm(h, p["g1"], p["be1"], groups) * m
    h = jnp.maximum(h, 0.0)
    h = _ref_conv1d(h, p["w2"], p["b2"], 1)
    h = _ref_group_norm(h, p["g2"], p["be2"], groups) * m
    return jnp.maximum(residual + h, 0.0)


if __name__ == "__main__":
    B, DIMS, OUT_DIMS, L, GROUPS = 2, 32, 64, 128, 16

    key = jax.random.PRNGKey(0)
    ks = jax.random.split(key, 11)

    # parameters in PyTorch layout (Conv1d weight = (out, in, k))
    params = {
        "w_sc": jax.random.normal(ks[0], (OUT_DIMS, DIMS), jnp.float32) * 0.1,
        "w1": jax.random.normal(ks[1], (DIMS, DIMS, 3), jnp.float32) * 0.1,
        "b1": jax.random.normal(ks[2], (DIMS,), jnp.float32) * 0.1,
        "g1": 1.0 + 0.1 * jax.random.normal(ks[3], (DIMS,), jnp.float32),
        "be1": 0.1 * jax.random.normal(ks[4], (DIMS,), jnp.float32),
        "w2": jax.random.normal(ks[5], (OUT_DIMS, DIMS, 3), jnp.float32) * 0.1,
        "b2": jax.random.normal(ks[6], (OUT_DIMS,), jnp.float32) * 0.1,
        "g2": 1.0 + 0.1 * jax.random.normal(ks[7], (OUT_DIMS,), jnp.float32),
        "be2": 0.1 * jax.random.normal(ks[8], (OUT_DIMS,), jnp.float32),
    }

    x = jax.random.normal(ks[9], (B, DIMS, L), jnp.float32)
    mask = jax.random.bernoulli(ks[10], 0.8, (B, 1, L))

    out = jax.block_until_ready(
        shallow_resnet_block_1d(x, mask, params, groups=GROUPS))
    ref = jax.block_until_ready(reference(x, mask, params, groups=GROUPS))

    assert out.shape == (B, OUT_DIMS, L)
    # conv/shortcut matmuls run with bf16 MXU inputs (f32 accumulate),
    # so compare at bf16-level tolerance.
    assert jnp.allclose(out, ref, rtol=2e-2, atol=2e-2), \
        f"max abs err {jnp.max(jnp.abs(out - ref))}"

    print("KERNEL_OK")
</pallas_src>

<mosaic_0001>
module attributes {stable_mosaic.version = 11 : i64} {
  func.func @_resnet_block_kernel(%arg0: i32, %arg1: memref<1x32x128xf32, #tpu.memory_space<vmem>>, %arg2: memref<1x1x128xf32, #tpu.memory_space<vmem>>, %arg3: memref<96x96xbf16, #tpu.memory_space<vmem>>, %arg4: memref<64x96xbf16, #tpu.memory_space<vmem>>, %arg5: memref<32x3xf32, #tpu.memory_space<vmem>>, %arg6: memref<64x3xf32, #tpu.memory_space<vmem>>, %arg7: memref<32x32xf32, #tpu.memory_space<vmem>>, %arg8: memref<64x64xf32, #tpu.memory_space<vmem>>, %arg9: memref<1x64x128xf32, #tpu.memory_space<vmem>>) attributes {dimension_semantics = [#tpu.dimension_semantics<parallel>], iteration_bounds = array<i64: 2>, scalar_prefetch = 0 : i64, scratch_operands = 0 : i64, tpu.core_type = #tpu.core_type<tc>, window_params = [{transform_indices = @transform_0, window_bounds = array<i64: 1, 32, 128>}, {transform_indices = @transform_1, window_bounds = array<i64: 1, 1, 128>}, {pipeline_mode = #tpu.pipeline_mode<synchronous>, transform_indices = @transform_2, window_bounds = array<i64: 96, 96>}, {pipeline_mode = #tpu.pipeline_mode<synchronous>, transform_indices = @transform_3, window_bounds = array<i64: 64, 96>}, {pipeline_mode = #tpu.pipeline_mode<synchronous>, transform_indices = @transform_4, window_bounds = array<i64: 32, 3>}, {pipeline_mode = #tpu.pipeline_mode<synchronous>, transform_indices = @transform_5, window_bounds = array<i64: 64, 3>}, {pipeline_mode = #tpu.pipeline_mode<synchronous>, transform_indices = @transform_6, window_bounds = array<i64: 32, 32>}, {pipeline_mode = #tpu.pipeline_mode<synchronous>, transform_indices = @transform_7, window_bounds = array<i64: 64, 64>}, {transform_indices = @transform_8, window_bounds = array<i64: 1, 64, 128>}]} {
    %c0 = arith.constant 0 : index
    %c0_0 = arith.constant 0 : index
    %0 = vector.load %arg3[%c0, %c0_0] : memref<96x96xbf16, #tpu.memory_space<vmem>>, vector<96x96xbf16>
    %c0_1 = arith.constant 0 : index
    %c0_2 = arith.constant 0 : index
    %1 = vector.load %arg4[%c0_1, %c0_2] : memref<64x96xbf16, #tpu.memory_space<vmem>>, vector<64x96xbf16>
    %c0_3 = arith.constant 0 : index
    %c0_4 = arith.constant 0 : index
    %2 = vector.load %arg5[%c0_3, %c0_4] : memref<32x3xf32, #tpu.memory_space<vmem>>, vector<32x3xf32>
    %c0_5 = arith.constant 0 : index
    %c0_6 = arith.constant 0 : index
    %3 = vector.load %arg6[%c0_5, %c0_6] : memref<64x3xf32, #tpu.memory_space<vmem>>, vector<64x3xf32>
    %4 = vector.extract_strided_slice %2 {offsets = [0, 0], sizes = [32, 1], strides = [1, 1]} : vector<32x3xf32> to vector<32x1xf32>
    %5 = vector.extract_strided_slice %2 {offsets = [0, 1], sizes = [32, 1], strides = [1, 1]} : vector<32x3xf32> to vector<32x1xf32>
    %6 = vector.extract_strided_slice %2 {offsets = [0, 2], sizes = [32, 1], strides = [1, 1]} : vector<32x3xf32> to vector<32x1xf32>
    %7 = vector.extract_strided_slice %3 {offsets = [0, 0], sizes = [64, 1], strides = [1, 1]} : vector<64x3xf32> to vector<64x1xf32>
    %8 = vector.extract_strided_slice %3 {offsets = [0, 1], sizes = [64, 1], strides = [1, 1]} : vector<64x3xf32> to vector<64x1xf32>
    %9 = vector.extract_strided_slice %3 {offsets = [0, 2], sizes = [64, 1], strides = [1, 1]} : vector<64x3xf32> to vector<64x1xf32>
    %c0_7 = arith.constant 0 : index
    %c0_8 = arith.constant 0 : index
    %10 = vector.load %arg7[%c0_7, %c0_8] : memref<32x32xf32, #tpu.memory_space<vmem>>, vector<32x32xf32>
    %c0_9 = arith.constant 0 : index
    %c0_10 = arith.constant 0 : index
    %11 = vector.load %arg8[%c0_9, %c0_10] : memref<64x64xf32, #tpu.memory_space<vmem>>, vector<64x64xf32>
    %12 = tpu.iota {dimensions = array<i32: 1>} : vector<32x128xi32>
    %c0_i32 = arith.constant 0 : i32
    %13 = vector.broadcast %c0_i32 : i32 to vector<32x128xi32>
    %14 = arith.cmpi eq, %12, %13 : vector<32x128xi32>
    %c127_i32 = arith.constant 127 : i32
    %15 = vector.broadcast %c127_i32 : i32 to vector<32x128xi32>
    %16 = arith.cmpi eq, %12, %15 : vector<32x128xi32>
    %c0_11 = arith.constant 0 : index
    %c0_12 = arith.constant 0 : index
    %c0_13 = arith.constant 0 : index
    %17 = vector.load %arg1[%c0_11, %c0_12, %c0_13] : memref<1x32x128xf32, #tpu.memory_space<vmem>>, vector<1x32x128xf32>
    %18 = vector.shape_cast %17 : vector<1x32x128xf32> to vector<32x128xf32>
    %c0_14 = arith.constant 0 : index
    %c0_15 = arith.constant 0 : index
    %c0_16 = arith.constant 0 : index
    %19 = vector.load %arg2[%c0_14, %c0_15, %c0_16] : memref<1x1x128xf32, #tpu.memory_space<vmem>>, vector<1x1x128xf32>
    %20 = vector.shape_cast %19 : vector<1x1x128xf32> to vector<1x128xf32>
    %c1_i32 = arith.constant 1 : i32
    %21 = tpu.dynamic_rotate %18 by %c1_i32 dim 1 : vector<32x128xf32>, i32 -> vector<32x128xf32>
    %cst = arith.constant 0.000000e+00 : f32
    %22 = vector.broadcast %cst : f32 to vector<32x128xf32>
    %23 = arith.select %14, %22, %21 : vector<32x128xi1>, vector<32x128xf32>
    %c127_i32_17 = arith.constant 127 : i32
    %24 = tpu.dynamic_rotate %18 by %c127_i32_17 dim 1 : vector<32x128xf32>, i32 -> vector<32x128xf32>
    %cst_18 = arith.constant 0.000000e+00 : f32
    %25 = vector.broadcast %cst_18 : f32 to vector<32x128xf32>
    %26 = arith.select %16, %25, %24 : vector<32x128xi1>, vector<32x128xf32>
    %27 = tpu.concatenate %23, %18, %26 in 0 : vector<32x128xf32>, vector<32x128xf32>, vector<32x128xf32> -> vector<96x128xf32>
    %28 = arith.truncf %27 : vector<96x128xf32> to vector<96x128xbf16>
    %cst_19 = arith.constant dense<0.000000e+00> : vector<96x128xf32>
    %29 = tpu.matmul %0, %28, %cst_19 {dimension_numbers = #tpu.dot_dimension_numbers<[1], [0], [0], [1], [0, 0, 1, 1], [], []>} : vector<96x96xbf16>, vector<96x128xbf16>, vector<96x128xf32> -> vector<96x128xf32>
    %30 = vector.extract_strided_slice %29 {offsets = [0, 0], sizes = [32, 128], strides = [1, 1]} : vector<96x128xf32> to vector<32x128xf32>
    %31 = vector.broadcast %4 : vector<32x1xf32> to vector<32x128xf32>
    %32 = arith.addf %30, %31 : vector<32x128xf32>
    %33 = vector.extract_strided_slice %29 {offsets = [32, 0], sizes = [64, 128], strides = [1, 1]} : vector<96x128xf32> to vector<64x128xf32>
    %cst_20 = arith.constant dense<0.000000e+00> : vector<32xf32>
    %34 = vector.multi_reduction <add>, %32, %cst_20 [1] : vector<32x128xf32> to vector<32xf32>
    %35 = vector.shape_cast %34 : vector<32xf32> to vector<32x1xf32>
    %36 = arith.mulf %32, %32 : vector<32x128xf32>
    %cst_21 = arith.constant dense<0.000000e+00> : vector<32xf32>
    %37 = vector.multi_reduction <add>, %36, %cst_21 [1] : vector<32x128xf32> to vector<32xf32>
    %38 = vector.shape_cast %37 : vector<32xf32> to vector<32x1xf32>
    %39 = tpu.concatenate %35, %38 in 1 : vector<32x1xf32>, vector<32x1xf32> -> vector<32x2xf32>
    %cst_22 = arith.constant dense<0.000000e+00> : vector<32x2xf32>
    %40 = tpu.matmul %10, %39, %cst_22 {dimension_numbers = #tpu.dot_dimension_numbers<[1], [0], [0], [1], [0, 0, 1, 1], [], []>} : vector<32x32xf32>, vector<32x2xf32>, vector<32x2xf32> -> vector<32x2xf32>
    %41 = vector.extract_strided_slice %40 {offsets = [0, 0], sizes = [32, 1], strides = [1, 1]} : vector<32x2xf32> to vector<32x1xf32>
    %42 = vector.extract_strided_slice %40 {offsets = [0, 1], sizes = [32, 1], strides = [1, 1]} : vector<32x2xf32> to vector<32x1xf32>
    %43 = arith.mulf %41, %41 : vector<32x1xf32>
    %44 = arith.subf %42, %43 : vector<32x1xf32>
    %cst_23 = arith.constant 9.99999974E-6 : f32
    %45 = vector.broadcast %cst_23 : f32 to vector<32x1xf32>
    %46 = arith.addf %44, %45 : vector<32x1xf32>
    %47 = math.rsqrt %46 : vector<32x1xf32>
    %48 = arith.mulf %5, %47 : vector<32x1xf32>
    %49 = arith.mulf %41, %48 : vector<32x1xf32>
    %50 = arith.subf %6, %49 : vector<32x1xf32>
    %51 = vector.broadcast %48 : vector<32x1xf32> to vector<32x128xf32>
    %52 = arith.mulf %32, %51 : vector<32x128xf32>
    %53 = vector.broadcast %50 : vector<32x1xf32> to vector<32x128xf32>
    %54 = arith.addf %52, %53 : vector<32x128xf32>
    %55 = vector.broadcast %20 : vector<1x128xf32> to vector<32x128xf32>
    %56 = arith.mulf %54, %55 : vector<32x128xf32>
    %cst_24 = arith.constant 0.000000e+00 : f32
    %57 = vector.broadcast %cst_24 : f32 to vector<32x128xf32>
    %58 = arith.maximumf %56, %57 : vector<32x128xf32>
    %c1_i32_25 = arith.constant 1 : i32
    %59 = tpu.dynamic_rotate %58 by %c1_i32_25 dim 1 : vector<32x128xf32>, i32 -> vector<32x128xf32>
    %cst_26 = arith.constant 0.000000e+00 : f32
    %60 = vector.broadcast %cst_26 : f32 to vector<32x128xf32>
    %61 = arith.select %14, %60, %59 : vector<32x128xi1>, vector<32x128xf32>
    %c127_i32_27 = arith.constant 127 : i32
    %62 = tpu.dynamic_rotate %58 by %c127_i32_27 dim 1 : vector<32x128xf32>, i32 -> vector<32x128xf32>
    %cst_28 = arith.constant 0.000000e+00 : f32
    %63 = vector.broadcast %cst_28 : f32 to vector<32x128xf32>
    %64 = arith.select %16, %63, %62 : vector<32x128xi1>, vector<32x128xf32>
    %65 = tpu.concatenate %61, %58, %64 in 0 : vector<32x128xf32>, vector<32x128xf32>, vector<32x128xf32> -> vector<96x128xf32>
    %66 = arith.truncf %65 : vector<96x128xf32> to vector<96x128xbf16>
    %cst_29 = arith.constant dense<0.000000e+00> : vector<64x128xf32>
    %67 = tpu.matmul %1, %66, %cst_29 {dimension_numbers = #tpu.dot_dimension_numbers<[1], [0], [0], [1], [0, 0, 1, 1], [], []>} : vector<64x96xbf16>, vector<96x128xbf16>, vector<64x128xf32> -> vector<64x128xf32>
    %68 = vector.broadcast %7 : vector<64x1xf32> to vector<64x128xf32>
    %69 = arith.addf %67, %68 : vector<64x128xf32>
    %cst_30 = arith.constant dense<0.000000e+00> : vector<64xf32>
    %70 = vector.multi_reduction <add>, %69, %cst_30 [1] : vector<64x128xf32> to vector<64xf32>
    %71 = vector.shape_cast %70 : vector<64xf32> to vector<64x1xf32>
    %72 = arith.mulf %69, %69 : vector<64x128xf32>
    %cst_31 = arith.constant dense<0.000000e+00> : vector<64xf32>
    %73 = vector.multi_reduction <add>, %72, %cst_31 [1] : vector<64x128xf32> to vector<64xf32>
    %74 = vector.shape_cast %73 : vector<64xf32> to vector<64x1xf32>
    %75 = tpu.concatenate %71, %74 in 1 : vector<64x1xf32>, vector<64x1xf32> -> vector<64x2xf32>
    %cst_32 = arith.constant dense<0.000000e+00> : vector<64x2xf32>
    %76 = tpu.matmul %11, %75, %cst_32 {dimension_numbers = #tpu.dot_dimension_numbers<[1], [0], [0], [1], [0, 0, 1, 1], [], []>} : vector<64x64xf32>, vector<64x2xf32>, vector<64x2xf32> -> vector<64x2xf32>
    %77 = vector.extract_strided_slice %76 {offsets = [0, 0], sizes = [64, 1], strides = [1, 1]} : vector<64x2xf32> to vector<64x1xf32>
    %78 = vector.extract_strided_slice %76 {offsets = [0, 1], sizes = [64, 1], strides = [1, 1]} : vector<64x2xf32> to vector<64x1xf32>
    %79 = arith.mulf %77, %77 : vector<64x1xf32>
    %80 = arith.subf %78, %79 : vector<64x1xf32>
    %cst_33 = arith.constant 9.99999974E-6 : f32
    %81 = vector.broadcast %cst_33 : f32 to vector<64x1xf32>
    %82 = arith.addf %80, %81 : vector<64x1xf32>
    %83 = math.rsqrt %82 : vector<64x1xf32>
    %84 = arith.mulf %8, %83 : vector<64x1xf32>
    %85 = arith.mulf %77, %84 : vector<64x1xf32>
    %86 = arith.subf %9, %85 : vector<64x1xf32>
    %87 = vector.broadcast %84 : vector<64x1xf32> to vector<64x128xf32>
    %88 = arith.mulf %69, %87 : vector<64x128xf32>
    %89 = vector.broadcast %86 : vector<64x1xf32> to vector<64x128xf32>
    %90 = arith.addf %88, %89 : vector<64x128xf32>
    %91 = arith.addf %33, %90 : vector<64x128xf32>
    %cst_34 = arith.constant 0.000000e+00 : f32
    %92 = vector.broadcast %cst_34 : f32 to vector<64x128xf32>
    %93 = arith.maximumf %91, %92 : vector<64x128xf32>
    %94 = vector.broadcast %20 : vector<1x128xf32> to vector<64x128xf32>
    %95 = arith.mulf %93, %94 : vector<64x128xf32>
    %c0_35 = arith.constant 0 : index
    %c0_36 = arith.constant 0 : index
    %c0_37 = arith.constant 0 : index
    %96 = vector.load %arg9[%c0_35, %c0_36, %c0_37] : memref<1x64x128xf32, #tpu.memory_space<vmem>>, vector<1x64x128xf32>
    %97 = vector.shape_cast %96 : vector<1x64x128xf32> to vector<64x128xf32>
    %98 = vector.shape_cast %95 : vector<64x128xf32> to vector<1x64x128xf32>
    tpu.vector_store %arg9[%c0_35, %c0_36, %c0_37], %98 {strides = array<i32>} : memref<1x64x128xf32, #tpu.memory_space<vmem>>, vector<1x64x128xf32>,
    return
  }
  func.func @transform_0(%arg0: i32) -> (i32, i32, i32) {
    %c0_i32 = arith.constant 0 : i32
    %c0_i32_0 = arith.constant 0 : i32
    %c0_i32_1 = arith.constant 0 : i32
    return %arg0, %c0_i32, %c0_i32_0 : i32, i32, i32
  }
  func.func @transform_1(%arg0: i32) -> (i32, i32, i32) {
    %c0_i32 = arith.constant 0 : i32
    %c0_i32_0 = arith.constant 0 : i32
    %c0_i32_1 = arith.constant 0 : i32
    return %arg0, %c0_i32, %c0_i32_0 : i32, i32, i32
  }
  func.func @transform_2(%arg0: i32) -> (i32, i32) {
    %c0_i32 = arith.constant 0 : i32
    %c0_i32_0 = arith.constant 0 : i32
    %c0_i32_1 = arith.constant 0 : i32
    return %c0_i32, %c0_i32_0 : i32, i32
  }
  func.func @transform_3(%arg0: i32) -> (i32, i32) {
    %c0_i32 = arith.constant 0 : i32
    %c0_i32_0 = arith.constant 0 : i32
    %c0_i32_1 = arith.constant 0 : i32
    return %c0_i32, %c0_i32_0 : i32, i32
  }
  func.func @transform_4(%arg0: i32) -> (i32, i32) {
    %c0_i32 = arith.constant 0 : i32
    %c0_i32_0 = arith.constant 0 : i32
    %c0_i32_1 = arith.constant 0 : i32
    return %c0_i32, %c0_i32_0 : i32, i32
  }
  func.func @transform_5(%arg0: i32) -> (i32, i32) {
    %c0_i32 = arith.constant 0 : i32
    %c0_i32_0 = arith.constant 0 : i32
    %c0_i32_1 = arith.constant 0 : i32
    return %c0_i32, %c0_i32_0 : i32, i32
  }
  func.func @transform_6(%arg0: i32) -> (i32, i32) {
    %c0_i32 = arith.constant 0 : i32
    %c0_i32_0 = arith.constant 0 : i32
    %c0_i32_1 = arith.constant 0 : i32
    return %c0_i32, %c0_i32_0 : i32, i32
  }
  func.func @transform_7(%arg0: i32) -> (i32, i32) {
    %c0_i32 = arith.constant 0 : i32
    %c0_i32_0 = arith.constant 0 : i32
    %c0_i32_1 = arith.constant 0 : i32
    return %c0_i32, %c0_i32_0 : i32, i32
  }
  func.func @transform_8(%arg0: i32) -> (i32, i32, i32) {
    %c0_i32 = arith.constant 0 : i32
    %c0_i32_0 = arith.constant 0 : i32
    %c0_i32_1 = arith.constant 0 : i32
    return %arg0, %c0_i32, %c0_i32_0 : i32, i32, i32
  }
}

</mosaic_0001>

<llo_original>
// kernel: tpu_custom_call.1
$region0: #{tpu_custom_call.1}
  #allocation0 [shape = 'u32[]', space=smem, size = 0x4, offset = 0x4, fixed_abs, tag = 'smem constant byte address 0x4 - core index']
  #allocation1 [shape = 'u32[144,128]{1,0:T(1,128)}', space=vmem, size = 0x12000, scoped, tag = 'internal scratch']
  %s0 = inlined_call_operand.vmem [shape: f32[2,32,128], index: 0, kind: input, shape index: {}]
  %s1 = inlined_call_operand.vmem [shape: f32[2,1,128], index: 1, kind: input, shape index: {}]
  %s2 = inlined_call_operand.hbm [shape: bf16[96,96], index: 2, kind: input, shape index: {}]
  %s3 = inlined_call_operand.hbm [shape: bf16[64,96], index: 3, kind: input, shape index: {}]
  %s4 = inlined_call_operand.vmem [shape: f32[32,3], index: 4, kind: input, shape index: {}]
  %s5 = inlined_call_operand.vmem [shape: f32[64,3], index: 5, kind: input, shape index: {}]
  %s6 = inlined_call_operand.hbm [shape: f32[32,32], index: 6, kind: input, shape index: {}]
  %s7 = inlined_call_operand.vmem [shape: f32[64,64], index: 7, kind: input, shape index: {}]
  %s8 = inlined_call_operand.hbm [shape: f32[2,64,128], index: 8, kind: output, shape index: {}]
  %s9 = sld [smem:[#allocation0]]
  $region77: #{tpu_custom_call.1} parent=0
    _
  %s11 = ssub.s32 1, %s9
  %s12 = scalar_select 0, %s11, %s9
  $region1: #{tpu_custom_call.1} parent=0
    #allocation2 [shape = 'u8[24576]{0}', space=vmem, size = 0x6000, scoped, tag = 'input window, operand 2, single buffered']
    #allocation3 [shape = 's32[2]{0}', space=sflag, size = 0x8, scoped, tag = 'scoped memory for tpu_custom_call.1']
    #allocation4 [shape = 's32[2]{0}', space=sflag, size = 0x8, scoped, tag = 'scoped memory for tpu_custom_call.1']
    #allocation5 [shape = 'u8[16384]{0}', space=vmem, size = 0x4000, scoped, tag = 'input window, operand 3, single buffered']
    #allocation6 [shape = 's32[1]{0}', space=sflag, size = 0x4, scoped, tag = 'scoped memory for tpu_custom_call.1']
    #allocation7 [shape = 'u8[16384]{0}', space=vmem, size = 0x4000, scoped, tag = 'input window, operand 6, single buffered']
    #allocation8 [shape = 'u8[65536]{0}', space=vmem, size = 0x10000, scoped, tag = 'output window, operand 0']
    %13 = vsyncpa [#allocation3], 0
    %14 = vsyncpa [#allocation6], 0
    %15 = vsyncpa [#allocation4], 0
    %s16 = scalar_lea.sflag [#allocation4], 1
    %17 = vsyncpa %s16, 0
    loop: start=0, step=1, limit=4
    $region2: #{tpu_custom_call.1} parent=1 // loop_pre_header
      _
    $region3: #{tpu_custom_call.1} parent=1 // loop_header
      %s19 = sphi 0, %s23
      %p20 = scmp.ge.s32.totalorder %s19, 4
      %s29 = sphi 0, %s31
      %s32 = sphi 0, %s29
      %s33 = sphi 0, %s32
      %s49 = sphi 0, %s33
      %s55 = sphi 0, %s57
      %s58 = sphi 0, %s55
      %s59 = sphi 0, %s58
      %s75 = sphi 0, %s59
      %s79 = sphi 0, %s79
      %s81 = sphi 0, %s79
      %s82 = sphi 0, %s81
      %s96 = sphi 0, %s82
      %s100 = sphi 0, %s100
      %s102 = sphi 0, %s100
      %s103 = sphi 0, %s102
      %s117 = sphi 0, %s103
      %s121 = sphi 0, %s121
      %s123 = sphi 0, %s121
      %s124 = sphi 0, %s123
      %s138 = sphi 0, %s124
      %s142 = sphi 0, %s142
      %s144 = sphi 0, %s142
      %s145 = sphi 0, %s144
      %s159 = sphi 0, %s145
      %s163 = sphi 0, %s163
      %s165 = sphi 0, %s163
      %s166 = sphi 0, %s165
      %s180 = sphi 0, %s166
      %s184 = sphi 0, %s184
      %s186 = sphi 0, %s184
      %s187 = sphi 0, %s186
      %s201 = sphi 0, %s187
      %s207 = sphi 0, %s209
      %s210 = sphi 0, %s207
      %s211 = sphi 0, %s210
      %s227 = sphi 0, %s211
    $region4: #{tpu_custom_call.1} parent=1 // loop_header_branch
      %22 = sbr.rel (%p20) target = $region8
    $region5: #{tpu_custom_call.1} parent=1 // loop_body
      %s24 = ssub.s32 %s19, 1
      %s25 = ssub.s32 %s19, 2
      %s26 = sadd.s32 %s19, 1
      %s27 = ssub.s32 %s19, %s26
      %p28 = scmp.eq.s32.totalorder %s27, 0
      %s30 = sadd.s32 %s29, 1
      %s31 = scalar_select %p28, %s29, %s30
      %p34 = pneg %p28
      %p35 = scmp.eq.s32.totalorder %s19, 1
      %p36 = por %p34, %p35
      %p37 = scmp.ne.s32.totalorder %s29, %s32
      %p38 = scmp.eq.s32.totalorder %s19, 0
      %p39 = por %p37, %p38
      %p40 = scmp.ne.s32.totalorder %s29, %s32
      %p41 = scmp.eq.s32.totalorder %s24, 1
      %p42 = por %p40, %p41
      %p43 = scmp.ne.s32.totalorder %s32, %s33
      %p44 = scmp.eq.s32.totalorder %s24, 0
      %p45 = por %p43, %p44
      %p46 = scmp.ne.s32.totalorder %s32, %s33
      %p47 = scmp.eq.s32.totalorder %s25, 1
      %p48 = por %p46, %p47
      %p50 = scmp.ne.s32.totalorder %s33, %s49
      %p51 = scmp.eq.s32.totalorder %s25, 0
      %p52 = por %p50, %p51
      %s53 = ssub.s32 %s19, %s26
      %p54 = scmp.eq.s32.totalorder %s53, 0
      %s56 = sadd.s32 %s55, 1
      %s57 = scalar_select %p54, %s55, %s56
      %p60 = pneg %p54
      %p61 = scmp.eq.s32.totalorder %s19, 1
      %p62 = por %p60, %p61
      %p63 = scmp.ne.s32.totalorder %s55, %s58
      %p64 = scmp.eq.s32.totalorder %s19, 0
      %p65 = por %p63, %p64
      %p66 = scmp.ne.s32.totalorder %s55, %s58
      %p67 = scmp.eq.s32.totalorder %s24, 1
      %p68 = por %p66, %p67
      %p69 = scmp.ne.s32.totalorder %s58, %s59
      %p70 = scmp.eq.s32.totalorder %s24, 0
      %p71 = por %p69, %p70
      %p72 = scmp.ne.s32.totalorder %s58, %s59
      %p73 = scmp.eq.s32.totalorder %s25, 1
      %p74 = por %p72, %p73
      %p76 = scmp.ne.s32.totalorder %s59, %s75
      %p77 = scmp.eq.s32.totalorder %s25, 0
      %p78 = por %p76, %p77
      %s80 = sadd.s32 %s79, 1
      %p83 = scmp.eq.s32.totalorder %s19, 1
      %p84 = scmp.ne.s32.totalorder %s79, %s81
      %p85 = scmp.eq.s32.totalorder %s19, 0
      %p86 = por %p84, %p85
      %p87 = scmp.ne.s32.totalorder %s79, %s81
      %p88 = scmp.eq.s32.totalorder %s24, 1
      %p89 = por %p87, %p88
      %p90 = scmp.ne.s32.totalorder %s81, %s82
      %p91 = scmp.eq.s32.totalorder %s24, 0
      %p92 = por %p90, %p91
      %p93 = scmp.ne.s32.totalorder %s81, %s82
      %p94 = scmp.eq.s32.totalorder %s25, 1
      %p95 = por %p93, %p94
      %p97 = scmp.ne.s32.totalorder %s82, %s96
      %p98 = scmp.eq.s32.totalorder %s25, 0
      %p99 = por %p97, %p98
      %s101 = sadd.s32 %s100, 1
      %p104 = scmp.eq.s32.totalorder %s19, 1
      %p105 = scmp.ne.s32.totalorder %s100, %s102
      %p106 = scmp.eq.s32.totalorder %s19, 0
      %p107 = por %p105, %p106
      %p108 = scmp.ne.s32.totalorder %s100, %s102
      %p109 = scmp.eq.s32.totalorder %s24, 1
      %p110 = por %p108, %p109
      %p111 = scmp.ne.s32.totalorder %s102, %s103
      %p112 = scmp.eq.s32.totalorder %s24, 0
      %p113 = por %p111, %p112
      %p114 = scmp.ne.s32.totalorder %s102, %s103
      %p115 = scmp.eq.s32.totalorder %s25, 1
      %p116 = por %p114, %p115
      %p118 = scmp.ne.s32.totalorder %s103, %s117
      %p119 = scmp.eq.s32.totalorder %s25, 0
      %p120 = por %p118, %p119
      %s122 = sadd.s32 %s121, 1
      %p125 = scmp.eq.s32.totalorder %s19, 1
      %p126 = scmp.ne.s32.totalorder %s121, %s123
      %p127 = scmp.eq.s32.totalorder %s19, 0
      %p128 = por %p126, %p127
      %p129 = scmp.ne.s32.totalorder %s121, %s123
      %p130 = scmp.eq.s32.totalorder %s24, 1
      %p131 = por %p129, %p130
      %p132 = scmp.ne.s32.totalorder %s123, %s124
      %p133 = scmp.eq.s32.totalorder %s24, 0
      %p134 = por %p132, %p133
      %p135 = scmp.ne.s32.totalorder %s123, %s124
      %p136 = scmp.eq.s32.totalorder %s25, 1
      %p137 = por %p135, %p136
      %p139 = scmp.ne.s32.totalorder %s124, %s138
      %p140 = scmp.eq.s32.totalorder %s25, 0
      %p141 = por %p139, %p140
      %s143 = sadd.s32 %s142, 1
      %p146 = scmp.eq.s32.totalorder %s19, 1
      %p147 = scmp.ne.s32.totalorder %s142, %s144
      %p148 = scmp.eq.s32.totalorder %s19, 0
      %p149 = por %p147, %p148
      %p150 = scmp.ne.s32.totalorder %s142, %s144
      %p151 = scmp.eq.s32.totalorder %s24, 1
      %p152 = por %p150, %p151
      %p153 = scmp.ne.s32.totalorder %s144, %s145
      %p154 = scmp.eq.s32.totalorder %s24, 0
      %p155 = por %p153, %p154
      %p156 = scmp.ne.s32.totalorder %s144, %s145
      %p157 = scmp.eq.s32.totalorder %s25, 1
      %p158 = por %p156, %p157
      %p160 = scmp.ne.s32.totalorder %s145, %s159
      %p161 = scmp.eq.s32.totalorder %s25, 0
      %p162 = por %p160, %p161
      %s164 = sadd.s32 %s163, 1
      %p167 = scmp.eq.s32.totalorder %s19, 1
      %p168 = scmp.ne.s32.totalorder %s163, %s165
      %p169 = scmp.eq.s32.totalorder %s19, 0
      %p170 = por %p168, %p169
      %p171 = scmp.ne.s32.totalorder %s163, %s165
      %p172 = scmp.eq.s32.totalorder %s24, 1
      %p173 = por %p171, %p172
      %p174 = scmp.ne.s32.totalorder %s165, %s166
      %p175 = scmp.eq.s32.totalorder %s24, 0
      %p176 = por %p174, %p175
      %p177 = scmp.ne.s32.totalorder %s165, %s166
      %p178 = scmp.eq.s32.totalorder %s25, 1
      %p179 = por %p177, %p178
      %p181 = scmp.ne.s32.totalorder %s166, %s180
      %p182 = scmp.eq.s32.totalorder %s25, 0
      %p183 = por %p181, %p182
      %s185 = sadd.s32 %s184, 1
      %p188 = scmp.eq.s32.totalorder %s19, 1
      %p189 = scmp.ne.s32.totalorder %s184, %s186
      %p190 = scmp.eq.s32.totalorder %s19, 0
      %p191 = por %p189, %p190
      %p192 = scmp.ne.s32.totalorder %s184, %s186
      %p193 = scmp.eq.s32.totalorder %s24, 1
      %p194 = por %p192, %p193
      %p195 = scmp.ne.s32.totalorder %s186, %s187
      %p196 = scmp.eq.s32.totalorder %s24, 0
      %p197 = por %p195, %p196
      %p198 = scmp.ne.s32.totalorder %s186, %s187
      %p199 = scmp.eq.s32.totalorder %s25, 1
      %p200 = por %p198, %p199
      %p202 = scmp.ne.s32.totalorder %s187, %s201
      %p203 = scmp.eq.s32.totalorder %s25, 0
      %p204 = por %p202, %p203
      %s205 = ssub.s32 %s19, %s26
      %p206 = scmp.eq.s32.totalorder %s205, 0
      %s208 = sadd.s32 %s207, 1
      %s209 = scalar_select %p206, %s207, %s208
      %p212 = pneg %p206
      %p213 = scmp.eq.s32.totalorder %s19, 1
      %p214 = por %p212, %p213
      %p215 = scmp.ne.s32.totalorder %s207, %s210
      %p216 = scmp.eq.s32.totalorder %s19, 0
      %p217 = por %p215, %p216
      %p218 = scmp.ne.s32.totalorder %s207, %s210
      %p219 = scmp.eq.s32.totalorder %s24, 1
      %p220 = por %p218, %p219
      %p221 = scmp.ne.s32.totalorder %s210, %s211
      %p222 = scmp.eq.s32.totalorder %s24, 0
      %p223 = por %p221, %p222
      %p224 = scmp.ne.s32.totalorder %s210, %s211
      %p225 = scmp.eq.s32.totalorder %s25, 1
      %p226 = por %p224, %p225
      %p228 = scmp.ne.s32.totalorder %s211, %s227
      %p229 = scmp.eq.s32.totalorder %s25, 0
      %p230 = por %p228, %p229
      %p231 = scmp.le.s32.totalorder 1, %s19
      %p232 = scmp.lt.s32.totalorder %s19, 3
      %p233 = pnand %p231, %p232
      %p234 = pneg %p233
      // Predicated region
      $region9: #{tpu_custom_call.1} parent=5 // pred_check
        _
      $region10: #{tpu_custom_call.1} parent=5 // pred_check_branch
        %236 = sbr.rel (%p233) target = $region12
      $region11: #{tpu_custom_call.1} parent=5 // pred_region
        %s237 = ssub.s32 %s19, 1
        // Predicated region
        $region13: #{tpu_custom_call.1} parent=11 // pred_check
          %p238 = pneg %p92
        $region14: #{tpu_custom_call.1} parent=11 // pred_check_branch
          %240 = sbr.rel (%p238) target = $region16
        $region15: #{tpu_custom_call.1} parent=11 // pred_region
          %s242 = ssub.s32 768, 768
          %243 = vsyncadd [#allocation3], %s242
          %s244 = sshll.u32 [#allocation2], 4
          %s245 = int_to_ptr.vmem [resolvable:$true] %s244
          %250 = dma.hbm_to_vmem [thread:$0]  %s2, 768, %s245, [#allocation3], 64, 64, 4
        $region16: #{tpu_custom_call.1} parent=11 // pred_fallthru
          _
        // Predicated region
        $region17: #{tpu_custom_call.1} parent=11 // pred_check
          %p251 = pneg %p113
        $region18: #{tpu_custom_call.1} parent=11 // pred_check_branch
          %253 = sbr.rel (%p251) target = $region20
        $region19: #{tpu_custom_call.1} parent=11 // pred_region
          %s255 = ssub.s32 512, 512
          %256 = vsyncadd [#allocation6], %s255
          %s257 = sshll.u32 [#allocation5], 4
          %s258 = int_to_ptr.vmem [resolvable:$true] %s257
          %263 = dma.hbm_to_vmem [thread:$0]  %s3, 512, %s258, [#allocation6], 64, 64, 4
        $region20: #{tpu_custom_call.1} parent=11 // pred_fallthru
          _
        // Predicated region
        $region21: #{tpu_custom_call.1} parent=11 // pred_check
          %p264 = pneg %p134
        $region22: #{tpu_custom_call.1} parent=11 // pred_check_branch
          %266 = sbr.rel (%p264) target = $region24
        $region23: #{tpu_custom_call.1} parent=11 // pred_region
          _
        $region24: #{tpu_custom_call.1} parent=11 // pred_fallthru
          _
        // Predicated region
        $region25: #{tpu_custom_call.1} parent=11 // pred_check
          %p267 = pneg %p155
        $region26: #{tpu_custom_call.1} parent=11 // pred_check_branch
          %269 = sbr.rel (%p267) target = $region28
        $region27: #{tpu_custom_call.1} parent=11 // pred_region
          _
        $region28: #{tpu_custom_call.1} parent=11 // pred_fallthru
          _
        // Predicated region
        $region29: #{tpu_custom_call.1} parent=11 // pred_check
          %p270 = pneg %p176
        $region30: #{tpu_custom_call.1} parent=11 // pred_check_branch
          %272 = sbr.rel (%p270) target = $region32
        $region31: #{tpu_custom_call.1} parent=11 // pred_region
          %s274 = ssub.s32 512, 512
          %275 = vsyncadd [#allocation6], %s274
          %s276 = sshll.u32 [#allocation7], 4
          %s277 = int_to_ptr.vmem [resolvable:$true] %s276
          %282 = dma.hbm_to_vmem [thread:$0]  %s6, 512, %s277, [#allocation6], 128, 128, 8
        $region32: #{tpu_custom_call.1} parent=11 // pred_fallthru
          _
        // Predicated region
        $region33: #{tpu_custom_call.1} parent=11 // pred_check
          %p283 = pneg %p197
        $region34: #{tpu_custom_call.1} parent=11 // pred_check_branch
          %285 = sbr.rel (%p283) target = $region36
        $region35: #{tpu_custom_call.1} parent=11 // pred_region
          _
        $region36: #{tpu_custom_call.1} parent=11 // pred_fallthru
          _
      $region12: #{tpu_custom_call.1} parent=5 // pred_fallthru
        _
      %p286 = scmp.lt.s32.totalorder %s19, 2
      // Predicated region
      $region37: #{tpu_custom_call.1} parent=5 // pred_check
        %p287 = pneg %p286
      $region38: #{tpu_custom_call.1} parent=5 // pred_check_branch
        %289 = sbr.rel (%p287) target = $region40
      $region39: #{tpu_custom_call.1} parent=5 // pred_region
        // Predicated region
        $region41: #{tpu_custom_call.1} parent=39 // pred_check
          %p290 = pneg %p39
        $region42: #{tpu_custom_call.1} parent=39 // pred_check_branch
          %292 = sbr.rel (%p290) target = $region44
        $region43: #{tpu_custom_call.1} parent=39 // pred_region
          %p293 = scmp.lt.s32.totalorder %s19, 1
          %s294 = scalar_select %p293, %s19, 1
          %s295 = smul.addr %s294, 4
          %s296 = smul.addr %s295, 8
          %s297 = scalar_lea.vmem %s0, %s296
        $region44: #{tpu_custom_call.1} parent=39 // pred_fallthru
          _
        // Predicated region
        $region45: #{tpu_custom_call.1} parent=39 // pred_check
          %p298 = pneg %p65
        $region46: #{tpu_custom_call.1} parent=39 // pred_check_branch
          %300 = sbr.rel (%p298) target = $region48
        $region47: #{tpu_custom_call.1} parent=39 // pred_region
          %p301 = scmp.lt.s32.totalorder %s19, 1
          %s302 = scalar_select %p301, %s19, 1
          %s303 = scalar_lea.vmem %s1, %s302
        $region48: #{tpu_custom_call.1} parent=39 // pred_fallthru
          _
      $region40: #{tpu_custom_call.1} parent=5 // pred_fallthru
        _
      %p304 = scmp.le.s32.totalorder 1, %s19
      %p305 = scmp.lt.s32.totalorder %s19, 3
      %p306 = pnand %p304, %p305
      %p307 = pneg %p306
      // Predicated region
      $region49: #{tpu_custom_call.1} parent=5 // pred_check
        _
      $region50: #{tpu_custom_call.1} parent=5 // pred_check_branch
        %309 = sbr.rel (%p306) target = $region52
      $region51: #{tpu_custom_call.1} parent=5 // pred_region
        %s310 = ssub.s32 %s19, 1
        // Predicated region
        $region53: #{tpu_custom_call.1} parent=51 // pred_check
          %p311 = pneg %p92
        $region54: #{tpu_custom_call.1} parent=51 // pred_check_branch
          %313 = sbr.rel (%p311) target = $region56
        $region55: #{tpu_custom_call.1} parent=51 // pred_region
          %314 = dma.done [#allocation3], 768
        $region56: #{tpu_custom_call.1} parent=51 // pred_fallthru
          _
        // Predicated region
        $region57: #{tpu_custom_call.1} parent=51 // pred_check
          %p315 = pneg %p113
        $region58: #{tpu_custom_call.1} parent=51 // pred_check_branch
          %317 = sbr.rel (%p315) target = $region60
        $region59: #{tpu_custom_call.1} parent=51 // pred_region
          %318 = dma.done [#allocation6], 512
        $region60: #{tpu_custom_call.1} parent=51 // pred_fallthru
          _
        // Predicated region
        $region61: #{tpu_custom_call.1} parent=51 // pred_check
          %p319 = pneg %p176
        $region62: #{tpu_custom_call.1} parent=51 // pred_check_branch
          %321 = sbr.rel (%p319) target = $region64
        $region63: #{tpu_custom_call.1} parent=51 // pred_region
          %322 = dma.done [#allocation6], 512
        $region64: #{tpu_custom_call.1} parent=51 // pred_fallthru
          _
        %p323 = scmp.lt.s32.totalorder %s24, 1
        %s324 = scalar_select %p323, %s24, 1
        %s325 = smul.addr %s324, 4
        %s326 = smul.addr %s325, 8
        %s327 = scalar_lea.vmem %s0, %s326
        %p328 = pneg %p45
        %p329 = pneg %p42
        %p330 = scmp.lt.s32.totalorder %s24, 1
        %s331 = scalar_select %p330, %s24, 1
        %s332 = scalar_lea.vmem %s1, %s331
        %p333 = pneg %p71
        %p334 = pneg %p68
        %p335 = pneg %p92
        %p336 = pneg %p89
        %p337 = pneg %p113
        %p338 = pneg %p110
        %p339 = pneg %p134
        %p340 = pneg %p131
        %p341 = pneg %p155
        %p342 = pneg %p152
        %p343 = pneg %p176
        %p344 = pneg %p173
        %p345 = pneg %p197
        %p346 = pneg %p194
        %p347 = pneg %p223
        %p348 = pneg %p220
        %s349 = sand.u32 %s210, 1
        %s350 = scalar_lea.sflag [#allocation4], %s349
        %s351 = sand.u32 %s210, 1
        %s352 = smul.addr %s351, 64
        %s353 = scalar_lea.vmem [#allocation8], %s352
        %p354 = scmp.lt.s32.totalorder %s24, 1
        %s355 = scalar_select %p354, %s24, 1
        %s356 = smul.addr %s355, 4
        %s357 = smul.addr %s356, 8
        %s358 = scalar_lea.vmem %s0, %s357
        %p359 = scmp.lt.s32.totalorder %s24, 1
        %s360 = scalar_select %p359, %s24, 1
        %s361 = scalar_lea.vmem %s1, %s360
        %v363 = vld [vmem:[#allocation2] sm:$0xf]
        %v364 = vld [vmem:[#allocation2 + $0x4] sm:$0xf]
        %v365 = vld [vmem:[#allocation2 + $0x8] sm:$0xf]
        %v366 = vld [vmem:[#allocation2 + $0xc] sm:$0xf]
        %v367 = vld [vmem:[#allocation2 + $0x10] sm:$0xf]
        %v368 = vld [vmem:[#allocation2 + $0x14] sm:$0xf]
        %v369 = vld [vmem:[#allocation2 + $0x18] sm:$0xf]
        %v370 = vld [vmem:[#allocation2 + $0x1c] sm:$0xf]
        %v371 = vld [vmem:[#allocation2 + $0x20] sm:$0xf]
        %v372 = vld [vmem:[#allocation2 + $0x24] sm:$0xf]
        %v373 = vld [vmem:[#allocation2 + $0x28] sm:$0xf]
        %v374 = vld [vmem:[#allocation2 + $0x2c] sm:$0xf]
        %v375 = vld [vmem:[#allocation5] sm:$0xf]
        %v376 = vld [vmem:[#allocation5 + $0x4] sm:$0xf]
        %v377 = vld [vmem:[#allocation5 + $0x8] sm:$0xf]
        %v378 = vld [vmem:[#allocation5 + $0xc] sm:$0xf]
        %v379 = vld [vmem:[#allocation5 + $0x10] sm:$0xf]
        %v380 = vld [vmem:[#allocation5 + $0x14] sm:$0xf]
        %v381 = vld [vmem:[#allocation5 + $0x18] sm:$0xf]
        %v382 = vld [vmem:[#allocation5 + $0x1c] sm:$0xf]
        %v383 = vld [vmem:[%s4] sm:$0xff]
        %v384 = vld [vmem:[%s4 + $0x8] sm:$0xff]
        %v385 = vld [vmem:[%s4 + $0x10] sm:$0xff]
        %v386 = vld [vmem:[%s4 + $0x18] sm:$0xff]
        %v387 = vld [vmem:[%s5] sm:$0xff]
        %v388 = vld [vmem:[%s5 + $0x8] sm:$0xff]
        %v389 = vld [vmem:[%s5 + $0x10] sm:$0xff]
        %v390 = vld [vmem:[%s5 + $0x18] sm:$0xff]
        %v391 = vld [vmem:[%s5 + $0x20] sm:$0xff]
        %v392 = vld [vmem:[%s5 + $0x28] sm:$0xff]
        %v393 = vld [vmem:[%s5 + $0x30] sm:$0xff]
        %v394 = vld [vmem:[%s5 + $0x38] sm:$0xff]
        %v395 = vld [vmem:[#allocation7] sm:$0xff]
        %v396 = vld [vmem:[#allocation7 + $0x8] sm:$0xff]
        %v397 = vld [vmem:[#allocation7 + $0x10] sm:$0xff]
        %v398 = vld [vmem:[#allocation7 + $0x18] sm:$0xff]
        %v399 = vld [vmem:[%s7] sm:$0xff]
        %v400 = vld [vmem:[%s7 + $0x8] sm:$0xff]
        %v401 = vld [vmem:[%s7 + $0x10] sm:$0xff]
        %v402 = vld [vmem:[%s7 + $0x18] sm:$0xff]
        %v403 = vld [vmem:[%s7 + $0x20] sm:$0xff]
        %v404 = vld [vmem:[%s7 + $0x28] sm:$0xff]
        %v405 = vld [vmem:[%s7 + $0x30] sm:$0xff]
        %v406 = vld [vmem:[%s7 + $0x38] sm:$0xff]
        %v407 = vlaneseq
        %v408 = vand.u32 %v407, 127
        %vm409 = vcmp.eq.s32.totalorder %v408, 0
        %vm410 = vcmp.eq.s32.totalorder %v408, 127
        %v411 = vld [vmem:[%s358] sm:$0xff]
        %v412 = vld [vmem:[%s358 + $0x8] sm:$0xff]
        %v413 = vld [vmem:[%s358 + $0x10] sm:$0xff]
        %v414 = vld [vmem:[%s358 + $0x18] sm:$0xff]
        %v415 = vld [vmem:[%s361] sm:$0x1]
        %416 = vrot.lane.b32.xlu0 %v411, 1
        %v417 = vpop.permute.xlu0 %416
        %418 = vrot.lane.b32.xlu0 %v412, 1
        %v419 = vpop.permute.xlu0 %418
        %420 = vrot.lane.b32.xlu0 %v413, 1
        %v421 = vpop.permute.xlu0 %420
        %422 = vrot.lane.b32.xlu0 %v414, 1
        %v423 = vpop.permute.xlu0 %422
        %v424 = vsel %vm409, 0.0, %v417
        %v425 = vsel %vm409, 0.0, %v419
        %v426 = vsel %vm409, 0.0, %v421
        %v427 = vsel %vm409, 0.0, %v423
        %428 = vrot.lane.b32.xlu0 %v411, 127
        %v429 = vpop.permute.xlu0 %428
        %430 = vrot.lane.b32.xlu0 %v412, 127
        %v431 = vpop.permute.xlu0 %430
        %432 = vrot.lane.b32.xlu0 %v413, 127
        %v433 = vpop.permute.xlu0 %432
        %434 = vrot.lane.b32.xlu0 %v414, 127
        %v435 = vpop.permute.xlu0 %434
        %v436 = vsel %vm410, 0.0, %v429
        %v437 = vsel %vm410, 0.0, %v431
        %v438 = vsel %vm410, 0.0, %v433
        %v439 = vsel %vm410, 0.0, %v435
        %v440 = vpack.c.bf16 %v425, %v424
        %v441 = vpack.c.bf16 %v427, %v426
        %v442 = vpack.c.bf16 %v412, %v411
        %v443 = vpack.c.bf16 %v414, %v413
        %v444 = vpack.c.bf16 %v437, %v436
        %v445 = vpack.c.bf16 %v439, %v438
        %v458 = vunpack.c.l.b16 %v363
        %v459 = vunpack.c.l.b16 %v364
        %v460 = vunpack.c.l.b16 %v365
        %v461 = vunpack.c.l.b16 %v366
        %v462 = vunpack.c.l.b16 %v367
        %v463 = vunpack.c.l.b16 %v368
        %v464 = vunpack.c.l.b16 %v369
        %v465 = vunpack.c.l.b16 %v370
        %v466 = vunpack.c.l.b16 %v371
        %v467 = vunpack.c.l.b16 %v372
        %v468 = vunpack.c.l.b16 %v373
        %v469 = vunpack.c.l.b16 %v374
        %v470 = vpack.c.b16 %v459, %v458
        %v471 = vpack.c.b16 %v461, %v460
        %v472 = vpack.c.b16 %v463, %v462
        %v473 = vpack.c.b16 %v465, %v464
        %v474 = vpack.c.b16 %v467, %v466
        %v475 = vpack.c.b16 %v469, %v468
        %vm476 = vcmask 785408
        %v478 = vsel %vm476, %v470, 0
        %v481 = vsel %vm476, %v471, 0
        %v484 = vsel %vm476, %v472, 0
        %v487 = vsel %vm476, %v473, 0
        %v490 = vsel %vm476, %v474, 0
        %v493 = vsel %vm476, %v475, 0
        %495 = vmatprep.subr.bf16.mxu0 0
        %496 = vmatpush1.bf16.msra.mxu0 %v440
        %497 = vmatprep.subr.bf16.mxu0 0
        %498 = vmatpush1.bf16.msra.mxu0 %v441
        %499 = vmatprep.subr.bf16.mxu0 0
        %500 = vmatpush1.bf16.msra.mxu0 %v442
        %501 = vmatprep.subr.bf16.mxu0 0
        %502 = vmatpush1.bf16.msra.mxu0 %v443
        %503 = vmatprep.subr.bf16.mxu0 0
        %504 = vmatpush1.bf16.msra.mxu0 %v444
        %505 = vmatprep.subr.bf16.mxu0 0
        %506 = vmatpush1.bf16.msra.mxu0 %v445
        %507 = vmatprep.subr.bf16.mxu0 0
        %508 = vmatpush1.bf16.msra.mxu0 0
        %509 = vmatprep.subr.bf16.mxu0 0
        %510 = vmatpush1.bf16.msra.mxu0 0
        %511 = vmatprep.subr.bf16.mxu0 0
        %512 = vmatpush1.bf16.msra.mxu0 0
        %513 = vmatprep.subr.bf16.mxu0 0
        %514 = vmatpush1.bf16.msra.mxu0 0
        %515 = vmatprep.subr.bf16.mxu0 0
        %516 = vmatpush1.bf16.msra.mxu0 0
        %517 = vmatprep.subr.bf16.mxu0 0
        %518 = vmatpush1.bf16.msra.mxu0 0
        %519 = vmatprep.subr.bf16.mxu0 0
        %520 = vmatpush1.bf16.msra.mxu0 0
        %521 = vmatprep.subr.bf16.mxu0 0
        %522 = vmatpush1.bf16.msra.mxu0 0
        %523 = vmatprep.subr.bf16.mxu0 0
        %524 = vmatpush1.bf16.msra.mxu0 0
        %525 = vmatprep.subr.bf16.mxu0 0
        %526 = vmatpush1.bf16.msra.mxu0 0
        %527 = vmatprep.mubr.bf16.mxu0 0
        %528 = vmatmul.mubr.bf16.gmra.mrb[0].mxu0 %v478
        %v529 = vpop.f32.mrb[0].mxu0
        %v530 = vadd.f32 0.0, %v529
        %v531 = vpop.f32.mrb[0].mxu0
        %v532 = vpop.f32.mrb[0].mxu0
        %v533 = vadd.f32 0.0, %v532
        %v534 = vpop.f32.mrb[0].mxu0
        %535 = vmatprep.mubr.bf16.mxu0 0
        %536 = vmatmul.mubr.bf16.gmra.mrb[0].mxu0 %v481
        %v537 = vpop.f32.mrb[0].mxu0
        %v538 = vadd.f32 0.0, %v537
        %v539 = vpop.f32.mrb[0].mxu0
        %v540 = vpop.f32.mrb[0].mxu0
        %v541 = vadd.f32 0.0, %v540
        %v542 = vpop.f32.mrb[0].mxu0
        %543 = vmatprep.mubr.bf16.mxu0 0
        %544 = vmatmul.mubr.bf16.gmra.mrb[0].mxu0 %v484
        %v545 = vpop.f32.mrb[0].mxu0
        %v546 = vadd.f32 0.0, %v545
        %v547 = vpop.f32.mrb[0].mxu0
        %v548 = vpop.f32.mrb[0].mxu0
        %v549 = vadd.f32 0.0, %v548
        %v550 = vpop.f32.mrb[0].mxu0
        %551 = vmatprep.mubr.bf16.mxu0 0
        %552 = vmatmul.mubr.bf16.gmra.mrb[0].mxu0 %v487
        %v553 = vpop.f32.mrb[0].mxu0
        %v554 = vadd.f32 0.0, %v553
        %v555 = vpop.f32.mrb[0].mxu0
        %v556 = vpop.f32.mrb[0].mxu0
        %v557 = vadd.f32 0.0, %v556
        %v558 = vpop.f32.mrb[0].mxu0
        %559 = vmatprep.mubr.bf16.mxu0 0
        %560 = vmatmul.mubr.bf16.gmra.mrb[0].mxu0 %v490
        %v561 = vpop.f32.mrb[0].mxu0
        %v562 = vadd.f32 0.0, %v561
        %v563 = vpop.f32.mrb[0].mxu0
        %v564 = vpop.f32.mrb[0].mxu0
        %v565 = vadd.f32 0.0, %v564
        %v566 = vpop.f32.mrb[0].mxu0
        %567 = vmatprep.mubr.bf16.mxu0 0
        %568 = vmatmul.mubr.bf16.gmra.mrb[0].mxu0 %v493
        %v569 = vpop.f32.mrb[0].mxu0
        %v570 = vadd.f32 0.0, %v569
        %v571 = vpop.f32.mrb[0].mxu0
        %v572 = vpop.f32.mrb[0].mxu0
        %v573 = vadd.f32 0.0, %v572
        %v574 = vpop.f32.mrb[0].mxu0
        %575 = vdwg.mxu0
        %577 = vset.pattern.permute.xlu0 0
        %578 = vperm.xlu0 %577, %v383
        %v579 = vpop.permute.xlu0 %578
        %582 = vset.pattern.permute.xlu0 0
        %583 = vperm.xlu0 %582, %v384
        %v584 = vpop.permute.xlu0 %583
        %587 = vset.pattern.permute.xlu0 0
        %588 = vperm.xlu0 %587, %v385
        %v589 = vpop.permute.xlu0 %588
        %592 = vset.pattern.permute.xlu0 0
        %593 = vperm.xlu0 %592, %v386
        %v594 = vpop.permute.xlu0 %593
        %v596 = vadd.f32 %v530, %v579
        %v597 = vadd.f32 %v533, %v584
        %v598 = vadd.f32 %v538, %v589
        %v599 = vadd.f32 %v541, %v594
        %600 = vadd.xlane.f32.xlu0 %v596
        %v601 = vpop.xlane.xlu0 %600
        %602 = vadd.xlane.f32.xlu0 %v597
        %v603 = vpop.xlane.xlu0 %602
        %604 = vadd.xlane.f32.xlu0 %v598
        %v605 = vpop.xlane.xlu0 %604
        %606 = vadd.xlane.f32.xlu0 %v599
        %v607 = vpop.xlane.xlu0 %606
        %v608 = vmul.f32 %v596, %v596
        %v609 = vmul.f32 %v597, %v597
        %v610 = vmul.f32 %v598, %v598
        %v611 = vmul.f32 %v599, %v599
        %612 = vadd.xlane.f32.xlu0 %v608
        %v613 = vpop.xlane.xlu0 %612
        %614 = vadd.xlane.f32.xlu0 %v609
        %v615 = vpop.xlane.xlu0 %614
        %616 = vadd.xlane.f32.xlu0 %v610
        %v617 = vpop.xlane.xlu0 %616
        %618 = vadd.xlane.f32.xlu0 %v611
        %v619 = vpop.xlane.xlu0 %618
        %vm620 = vcmask 7168
        %v621 = vsel %vm620, %v601, %v613
        %v622 = vsel %vm620, %v603, %v615
        %v623 = vsel %vm620, %v605, %v617
        %v624 = vsel %vm620, %v607, %v619
        %vm625 = vcmask 261120
        %v627 = vsel %vm625, %v395, 0
        %v630 = vsel %vm625, %v396, 0
        %v633 = vsel %vm625, %v397, 0
        %v636 = vsel %vm625, %v398, 0
        %638 = vmatprep.subr.mxu0 0.0
        %639 = vmatpush1.msra.mxu0 %v621
        %640 = vmatprep.subr.mxu0 0.0
        %641 = vmatpush1.msra.mxu0 %v622
        %642 = vmatprep.subr.mxu0 0.0
        %643 = vmatpush1.msra.mxu0 %v623
        %644 = vmatprep.subr.mxu0 0.0
        %645 = vmatpush1.msra.mxu0 %v624
        %646 = vmatprep.subr.mxu0 0.0
        %647 = vmatpush1.msra.mxu0 0.0
        %648 = vmatprep.subr.mxu0 0.0
        %649 = vmatpush1.msra.mxu0 0.0
        %650 = vmatprep.subr.mxu0 0.0
        %651 = vmatpush1.msra.mxu0 0.0
        %652 = vmatprep.subr.mxu0 0.0
        %653 = vmatpush1.msra.mxu0 0.0
        %654 = vmatprep.subr.mxu0 0.0
        %655 = vmatpush1.msra.mxu0 0.0
        %656 = vmatprep.subr.mxu0 0.0
        %657 = vmatpush1.msra.mxu0 0.0
        %658 = vmatprep.subr.mxu0 0.0
        %659 = vmatpush1.msra.mxu0 0.0
        %660 = vmatprep.subr.mxu0 0.0
        %661 = vmatpush1.msra.mxu0 0.0
        %662 = vmatprep.subr.mxu0 0.0
        %663 = vmatpush1.msra.mxu0 0.0
        %664 = vmatprep.subr.mxu0 0.0
        %665 = vmatpush1.msra.mxu0 0.0
        %666 = vmatprep.subr.mxu0 0.0
        %667 = vmatpush1.msra.mxu0 0.0
        %668 = vmatprep.subr.mxu0 0.0
        %669 = vmatpush1.msra.mxu0 0.0
        %670 = vmatprep.subr.mxu0 0.0
        %671 = vmatpush1.msra.mxu0 0.0
        %672 = vmatprep.subr.mxu0 0.0
        %673 = vmatpush1.msra.mxu0 0.0
        %674 = vmatprep.subr.mxu0 0.0
        %675 = vmatpush1.msra.mxu0 0.0
        %676 = vmatprep.subr.mxu0 0.0
        %677 = vmatpush1.msra.mxu0 0.0
        %678 = vmatprep.subr.mxu0 0.0
        %679 = vmatpush1.msra.mxu0 0.0
        %680 = vmatprep.subr.mxu0 0.0
        %681 = vmatpush1.msra.mxu0 0.0
        %682 = vmatprep.subr.mxu0 0.0
        %683 = vmatpush1.msra.mxu0 0.0
        %684 = vmatprep.subr.mxu0 0.0
        %685 = vmatpush1.msra.mxu0 0.0
        %686 = vmatprep.subr.mxu0 0.0
        %687 = vmatpush1.msra.mxu0 0.0
        %688 = vmatprep.subr.mxu0 0.0
        %689 = vmatpush1.msra.mxu0 0.0
        %690 = vmatprep.subr.mxu0 0.0
        %691 = vmatpush1.msra.mxu0 0.0
        %692 = vmatprep.subr.mxu0 0.0
        %693 = vmatpush1.msra.mxu0 0.0
        %694 = vmatprep.subr.mxu0 0.0
        %695 = vmatpush1.msra.mxu0 0.0
        %696 = vmatprep.subr.mxu0 0.0
        %697 = vmatpush1.msra.mxu0 0.0
        %698 = vmatprep.subr.mxu0 0.0
        %699 = vmatpush1.msra.mxu0 0.0
        %700 = vmatprep.subr.mxu0 0.0
        %701 = vmatpush1.msra.mxu0 0.0
        %702 = vmatprep.mubr.f32.mxu0 0.0
        %703 = vmatmul.mubr.f32.gmra.mrb[0].mxu0 %v627
        %v704 = vpop.f32.mrb[0].mxu0
        %v705 = vadd.f32 0.0, %v704
        %v706 = vpop.f32.mrb[0].mxu0
        %707 = vmatprep.mubr.f32.mxu0 0.0
        %708 = vmatmul.mubr.f32.gmra.mrb[0].mxu0 %v630
        %v709 = vpop.f32.mrb[0].mxu0
        %v710 = vadd.f32 0.0, %v709
        %v711 = vpop.f32.mrb[0].mxu0
        %712 = vmatprep.mubr.f32.mxu0 0.0
        %713 = vmatmul.mubr.f32.gmra.mrb[0].mxu0 %v633
        %v714 = vpop.f32.mrb[0].mxu0
        %v715 = vadd.f32 0.0, %v714
        %v716 = vpop.f32.mrb[0].mxu0
        %717 = vmatprep.mubr.f32.mxu0 0.0
        %718 = vmatmul.mubr.f32.gmra.mrb[0].mxu0 %v636
        %v719 = vpop.f32.mrb[0].mxu0
        %v720 = vadd.f32 0.0, %v719
        %v721 = vpop.f32.mrb[0].mxu0
        %722 = vdwg.mxu0
        %v723 = vmul.f32 %v705, %v705
        %v724 = vmul.f32 %v710, %v710
        %v725 = vmul.f32 %v715, %v715
        %v726 = vmul.f32 %v720, %v720
        %731 = vrot.lane.b32.xlu0 %v723, 1
        %v732 = vpop.permute.xlu0 %731
        %733 = vrot.lane.b32.xlu0 %v724, 1
        %v734 = vpop.permute.xlu0 %733
        %735 = vrot.lane.b32.xlu0 %v725, 1
        %v736 = vpop.permute.xlu0 %735
        %737 = vrot.lane.b32.xlu0 %v726, 1
        %v738 = vpop.permute.xlu0 %737
        %v743 = vsub.f32 %v705, %v732
        %v744 = vsub.f32 %v710, %v734
        %v745 = vsub.f32 %v715, %v736
        %v746 = vsub.f32 %v720, %v738
        %v747 = vadd.f32 %v743, 1e-05
        %v748 = vadd.f32 %v744, 1e-05
        %v749 = vadd.f32 %v745, 1e-05
        %v750 = vadd.f32 %v746, 1e-05
        %v751 = vrsqrt.pop %v747
        %v752 = vrsqrt.pop %v748
        %v753 = vrsqrt.pop %v749
        %v754 = vrsqrt.pop %v750
        %v755 = vmul.f32 %v383, %v751
        %v756 = vmul.f32 %v384, %v752
        %v757 = vmul.f32 %v385, %v753
        %v758 = vmul.f32 %v386, %v754
        %763 = vrot.lane.b32.xlu0 %v755, 127
        %v764 = vpop.permute.xlu0 %763
        %765 = vrot.lane.b32.xlu0 %v756, 127
        %v766 = vpop.permute.xlu0 %765
        %767 = vrot.lane.b32.xlu0 %v757, 127
        %v768 = vpop.permute.xlu0 %767
        %769 = vrot.lane.b32.xlu0 %v758, 127
        %v770 = vpop.permute.xlu0 %769
        %v775 = vmul.f32 %v705, %v764
        %v776 = vmul.f32 %v710, %v766
        %v777 = vmul.f32 %v715, %v768
        %v778 = vmul.f32 %v720, %v770
        %783 = vrot.lane.b32.xlu0 %v775, 2
        %v784 = vpop.permute.xlu0 %783
        %785 = vrot.lane.b32.xlu0 %v776, 2
        %v786 = vpop.permute.xlu0 %785
        %787 = vrot.lane.b32.xlu0 %v777, 2
        %v788 = vpop.permute.xlu0 %787
        %789 = vrot.lane.b32.xlu0 %v778, 2
        %v790 = vpop.permute.xlu0 %789
        %v795 = vsub.f32 %v383, %v784
        %v796 = vsub.f32 %v384, %v786
        %v797 = vsub.f32 %v385, %v788
        %v798 = vsub.f32 %v386, %v790
        %799 = vset.pattern.permute.xlu0 1
        %800 = vperm.xlu0 %799, %v755
        %v801 = vpop.permute.xlu0 %800
        %803 = vset.pattern.permute.xlu0 1
        %804 = vperm.xlu0 %803, %v756
        %v805 = vpop.permute.xlu0 %804
        %807 = vset.pattern.permute.xlu0 1
        %808 = vperm.xlu0 %807, %v757
        %v809 = vpop.permute.xlu0 %808
        %811 = vset.pattern.permute.xlu0 1
        %812 = vperm.xlu0 %811, %v758
        %v813 = vpop.permute.xlu0 %812
        %v815 = vmul.f32 %v596, %v801
        %v816 = vmul.f32 %v597, %v805
        %v817 = vmul.f32 %v598, %v809
        %v818 = vmul.f32 %v599, %v813
        %820 = vset.pattern.permute.xlu0 2
        %821 = vperm.xlu0 %820, %v795
        %v822 = vpop.permute.xlu0 %821
        %825 = vset.pattern.permute.xlu0 2
        %826 = vperm.xlu0 %825, %v796
        %v827 = vpop.permute.xlu0 %826
        %830 = vset.pattern.permute.xlu0 2
        %831 = vperm.xlu0 %830, %v797
        %v832 = vpop.permute.xlu0 %831
        %835 = vset.pattern.permute.xlu0 2
        %836 = vperm.xlu0 %835, %v798
        %v837 = vpop.permute.xlu0 %836
        %v839 = vadd.f32 %v815, %v822
        %v840 = vadd.f32 %v816, %v827
        %v841 = vadd.f32 %v817, %v832
        %v842 = vadd.f32 %v818, %v837
        %v844 = vlaneseq
        %v845 = vshrl.u32 %v844, 7
        %v846 = vsub.s32 0, %v845
        %v847 = vrot.slane %v415, %v846
        %v849 = vmul.f32 %v839, %v847
        %v850 = vmul.f32 %v840, %v847
        %v851 = vmul.f32 %v841, %v847
        %v852 = vmul.f32 %v842, %v847
        %v853 = vmax.f32 %v849, 0.0
        %v854 = vmax.f32 %v850, 0.0
        %v855 = vmax.f32 %v851, 0.0
        %v856 = vmax.f32 %v852, 0.0
        %857 = vrot.lane.b32.xlu0 %v853, 1
        %v858 = vpop.permute.xlu0 %857
        %859 = vrot.lane.b32.xlu0 %v854, 1
        %v860 = vpop.permute.xlu0 %859
        %861 = vrot.lane.b32.xlu0 %v855, 1
        %v862 = vpop.permute.xlu0 %861
        %863 = vrot.lane.b32.xlu0 %v856, 1
        %v864 = vpop.permute.xlu0 %863
        %v865 = vsel %vm409, 0.0, %v858
        %v866 = vsel %vm409, 0.0, %v860
        %v867 = vsel %vm409, 0.0, %v862
        %v868 = vsel %vm409, 0.0, %v864
        %869 = vrot.lane.b32.xlu0 %v853, 127
        %v870 = vpop.permute.xlu0 %869
        %871 = vrot.lane.b32.xlu0 %v854, 127
        %v872 = vpop.permute.xlu0 %871
        %873 = vrot.lane.b32.xlu0 %v855, 127
        %v874 = vpop.permute.xlu0 %873
        %875 = vrot.lane.b32.xlu0 %v856, 127
        %v876 = vpop.permute.xlu0 %875
        %v877 = vsel %vm410, 0.0, %v870
        %v878 = vsel %vm410, 0.0, %v872
        %v879 = vsel %vm410, 0.0, %v874
        %v880 = vsel %vm410, 0.0, %v876
        %v881 = vpack.c.bf16 %v866, %v865
        %v882 = vpack.c.bf16 %v868, %v867
        %v883 = vpack.c.bf16 %v854, %v853
        %v884 = vpack.c.bf16 %v856, %v855
        %v885 = vpack.c.bf16 %v878, %v877
        %v886 = vpack.c.bf16 %v880, %v879
        %888 = vset.pattern.permute.xlu0 0
        %889 = vperm.xlu0 %888, %v387
        %v890 = vpop.permute.xlu0 %889
        %893 = vset.pattern.permute.xlu0 0
        %894 = vperm.xlu0 %893, %v388
        %v895 = vpop.permute.xlu0 %894
        %898 = vset.pattern.permute.xlu0 0
        %899 = vperm.xlu0 %898, %v389
        %v900 = vpop.permute.xlu0 %899
        %903 = vset.pattern.permute.xlu0 0
        %904 = vperm.xlu0 %903, %v390
        %v905 = vpop.permute.xlu0 %904
        %908 = vset.pattern.permute.xlu0 0
        %909 = vperm.xlu0 %908, %v391
        %v910 = vpop.permute.xlu0 %909
        %913 = vset.pattern.permute.xlu0 0
        %914 = vperm.xlu0 %913, %v392
        %v915 = vpop.permute.xlu0 %914
        %918 = vset.pattern.permute.xlu0 0
        %919 = vperm.xlu0 %918, %v393
        %v920 = vpop.permute.xlu0 %919
        %923 = vset.pattern.permute.xlu0 0
        %924 = vperm.xlu0 %923, %v394
        %v925 = vpop.permute.xlu0 %924
        %v935 = vunpack.c.l.b16 %v375
        %v936 = vunpack.c.l.b16 %v376
        %v937 = vunpack.c.l.b16 %v377
        %v938 = vunpack.c.l.b16 %v378
        %v939 = vunpack.c.l.b16 %v379
        %v940 = vunpack.c.l.b16 %v380
        %v941 = vunpack.c.l.b16 %v381
        %v942 = vunpack.c.l.b16 %v382
        %v943 = vpack.c.b16 %v936, %v935
        %v944 = vpack.c.b16 %v938, %v937
        %v945 = vpack.c.b16 %v940, %v939
        %v946 = vpack.c.b16 %v942, %v941
        %v948 = vsel %vm476, %v943, 0
        %v951 = vsel %vm476, %v944, 0
        %v954 = vsel %vm476, %v945, 0
        %v957 = vsel %vm476, %v946, 0
        %959 = vmatprep.subr.bf16.mxu0 0
        %960 = vmatpush1.bf16.msra.mxu0 %v881
        %961 = vmatprep.subr.bf16.mxu0 0
        %962 = vmatpush1.bf16.msra.mxu0 %v882
        %963 = vmatprep.subr.bf16.mxu0 0
        %964 = vmatpush1.bf16.msra.mxu0 %v883
        %965 = vmatprep.subr.bf16.mxu0 0
        %966 = vmatpush1.bf16.msra.mxu0 %v884
        %967 = vmatprep.subr.bf16.mxu0 0
        %968 = vmatpush1.bf16.msra.mxu0 %v885
        %969 = vmatprep.subr.bf16.mxu0 0
        %970 = vmatpush1.bf16.msra.mxu0 %v886
        %971 = vmatprep.subr.bf16.mxu0 0
        %972 = vmatpush1.bf16.msra.mxu0 0
        %973 = vmatprep.subr.bf16.mxu0 0
        %974 = vmatpush1.bf16.msra.mxu0 0
        %975 = vmatprep.subr.bf16.mxu0 0
        %976 = vmatpush1.bf16.msra.mxu0 0
        %977 = vmatprep.subr.bf16.mxu0 0
        %978 = vmatpush1.bf16.msra.mxu0 0
        %979 = vmatprep.subr.bf16.mxu0 0
        %980 = vmatpush1.bf16.msra.mxu0 0
        %981 = vmatprep.subr.bf16.mxu0 0
        %982 = vmatpush1.bf16.msra.mxu0 0
        %983 = vmatprep.subr.bf16.mxu0 0
        %984 = vmatpush1.bf16.msra.mxu0 0
        %985 = vmatprep.subr.bf16.mxu0 0
        %986 = vmatpush1.bf16.msra.mxu0 0
        %987 = vmatprep.subr.bf16.mxu0 0
        %988 = vmatpush1.bf16.msra.mxu0 0
        %989 = vmatprep.subr.bf16.mxu0 0
        %990 = vmatpush1.bf16.msra.mxu0 0
        %991 = vmatprep.mubr.bf16.mxu0 0
        %992 = vmatmul.mubr.bf16.gmra.mrb[0].mxu0 %v948
        %v993 = vpop.f32.mrb[0].mxu0
        %v994 = vadd.f32 %v890, %v993
        %v995 = vpop.f32.mrb[0].mxu0
        %v996 = vpop.f32.mrb[0].mxu0
        %v997 = vadd.f32 %v895, %v996
        %v998 = vpop.f32.mrb[0].mxu0
        %999 = vmatprep.mubr.bf16.mxu0 0
        %1000 = vmatmul.mubr.bf16.gmra.mrb[0].mxu0 %v951
        %v1001 = vpop.f32.mrb[0].mxu0
        %v1002 = vadd.f32 %v900, %v1001
        %v1003 = vpop.f32.mrb[0].mxu0
        %v1004 = vpop.f32.mrb[0].mxu0
        %v1005 = vadd.f32 %v905, %v1004
        %v1006 = vpop.f32.mrb[0].mxu0
        %1007 = vmatprep.mubr.bf16.mxu0 0
        %1008 = vmatmul.mubr.bf16.gmra.mrb[0].mxu0 %v954
        %v1009 = vpop.f32.mrb[0].mxu0
        %v1010 = vadd.f32 %v910, %v1009
        %v1011 = vpop.f32.mrb[0].mxu0
        %v1012 = vpop.f32.mrb[0].mxu0
        %v1013 = vadd.f32 %v915, %v1012
        %v1014 = vpop.f32.mrb[0].mxu0
        %1015 = vmatprep.mubr.bf16.mxu0 0
        %1016 = vmatmul.mubr.bf16.gmra.mrb[0].mxu0 %v957
        %v1017 = vpop.f32.mrb[0].mxu0
        %v1018 = vadd.f32 %v920, %v1017
        %v1019 = vpop.f32.mrb[0].mxu0
        %v1020 = vpop.f32.mrb[0].mxu0
        %v1021 = vadd.f32 %v925, %v1020
        %v1022 = vpop.f32.mrb[0].mxu0
        %1023 = vdwg.mxu0
        %1024 = vadd.xlane.f32.xlu0 %v994
        %v1025 = vpop.xlane.xlu0 %1024
        %1026 = vadd.xlane.f32.xlu0 %v997
        %v1027 = vpop.xlane.xlu0 %1026
        %1028 = vadd.xlane.f32.xlu0 %v1002
        %v1029 = vpop.xlane.xlu0 %1028
        %1030 = vadd.xlane.f32.xlu0 %v1005
        %v1031 = vpop.xlane.xlu0 %1030
        %1032 = vadd.xlane.f32.xlu0 %v1010
        %v1033 = vpop.xlane.xlu0 %1032
        %1034 = vadd.xlane.f32.xlu0 %v1013
        %v1035 = vpop.xlane.xlu0 %1034
        %1036 = vadd.xlane.f32.xlu0 %v1018
        %v1037 = vpop.xlane.xlu0 %1036
        %1038 = vadd.xlane.f32.xlu0 %v1021
        %v1039 = vpop.xlane.xlu0 %1038
        %v1040 = vmul.f32 %v994, %v994
        %v1041 = vmul.f32 %v997, %v997
        %v1042 = vmul.f32 %v1002, %v1002
        %v1043 = vmul.f32 %v1005, %v1005
        %v1044 = vmul.f32 %v1010, %v1010
        %v1045 = vmul.f32 %v1013, %v1013
        %v1046 = vmul.f32 %v1018, %v1018
        %v1047 = vmul.f32 %v1021, %v1021
        %1048 = vadd.xlane.f32.xlu0 %v1040
        %v1049 = vpop.xlane.xlu0 %1048
        %1050 = vadd.xlane.f32.xlu0 %v1041
        %v1051 = vpop.xlane.xlu0 %1050
        %1052 = vadd.xlane.f32.xlu0 %v1042
        %v1053 = vpop.xlane.xlu0 %1052
        %1054 = vadd.xlane.f32.xlu0 %v1043
        %v1055 = vpop.xlane.xlu0 %1054
        %1056 = vadd.xlane.f32.xlu0 %v1044
        %v1057 = vpop.xlane.xlu0 %1056
        %1058 = vadd.xlane.f32.xlu0 %v1045
        %v1059 = vpop.xlane.xlu0 %1058
        %1060 = vadd.xlane.f32.xlu0 %v1046
        %v1061 = vpop.xlane.xlu0 %1060
        %1062 = vadd.xlane.f32.xlu0 %v1047
        %v1063 = vpop.xlane.xlu0 %1062
        %v1064 = vsel %vm620, %v1025, %v1049
        %v1065 = vsel %vm620, %v1027, %v1051
        %v1066 = vsel %vm620, %v1029, %v1053
        %v1067 = vsel %vm620, %v1031, %v1055
        %v1068 = vsel %vm620, %v1033, %v1057
        %v1069 = vsel %vm620, %v1035, %v1059
        %v1070 = vsel %vm620, %v1037, %v1061
        %v1071 = vsel %vm620, %v1039, %v1063
        %vm1072 = vcmask 523264
        %v1074 = vsel %vm1072, %v399, 0
        %v1077 = vsel %vm1072, %v400, 0
        %v1080 = vsel %vm1072, %v401, 0
        %v1083 = vsel %vm1072, %v402, 0
        %v1086 = vsel %vm1072, %v403, 0
        %v1089 = vsel %vm1072, %v404, 0
        %v1092 = vsel %vm1072, %v405, 0
        %v1095 = vsel %vm1072, %v406, 0
        %1097 = vmatprep.subr.mxu0 0.0
        %1098 = vmatpush1.msra.mxu0 %v1064
        %1099 = vmatprep.subr.mxu0 0.0
        %1100 = vmatpush1.msra.mxu0 %v1065
        %1101 = vmatprep.subr.mxu0 0.0
        %1102 = vmatpush1.msra.mxu0 %v1066
        %1103 = vmatprep.subr.mxu0 0.0
        %1104 = vmatpush1.msra.mxu0 %v1067
        %1105 = vmatprep.subr.mxu0 0.0
        %1106 = vmatpush1.msra.mxu0 %v1068
        %1107 = vmatprep.subr.mxu0 0.0
        %1108 = vmatpush1.msra.mxu0 %v1069
        %1109 = vmatprep.subr.mxu0 0.0
        %1110 = vmatpush1.msra.mxu0 %v1070
        %1111 = vmatprep.subr.mxu0 0.0
        %1112 = vmatpush1.msra.mxu0 %v1071
        %1113 = vmatprep.subr.mxu0 0.0
        %1114 = vmatpush1.msra.mxu0 0.0
        %1115 = vmatprep.subr.mxu0 0.0
        %1116 = vmatpush1.msra.mxu0 0.0
        %1117 = vmatprep.subr.mxu0 0.0
        %1118 = vmatpush1.msra.mxu0 0.0
        %1119 = vmatprep.subr.mxu0 0.0
        %1120 = vmatpush1.msra.mxu0 0.0
        %1121 = vmatprep.subr.mxu0 0.0
        %1122 = vmatpush1.msra.mxu0 0.0
        %1123 = vmatprep.subr.mxu0 0.0
        %1124 = vmatpush1.msra.mxu0 0.0
        %1125 = vmatprep.subr.mxu0 0.0
        %1126 = vmatpush1.msra.mxu0 0.0
        %1127 = vmatprep.subr.mxu0 0.0
        %1128 = vmatpush1.msra.mxu0 0.0
        %1129 = vmatprep.subr.mxu0 0.0
        %1130 = vmatpush1.msra.mxu0 0.0
        %1131 = vmatprep.subr.mxu0 0.0
        %1132 = vmatpush1.msra.mxu0 0.0
        %1133 = vmatprep.subr.mxu0 0.0
        %1134 = vmatpush1.msra.mxu0 0.0
        %1135 = vmatprep.subr.mxu0 0.0
        %1136 = vmatpush1.msra.mxu0 0.0
        %1137 = vmatprep.subr.mxu0 0.0
        %1138 = vmatpush1.msra.mxu0 0.0
        %1139 = vmatprep.subr.mxu0 0.0
        %1140 = vmatpush1.msra.mxu0 0.0
        %1141 = vmatprep.subr.mxu0 0.0
        %1142 = vmatpush1.msra.mxu0 0.0
        %1143 = vmatprep.subr.mxu0 0.0
        %1144 = vmatpush1.msra.mxu0 0.0
        %1145 = vmatprep.subr.mxu0 0.0
        %1146 = vmatpush1.msra.mxu0 0.0
        %1147 = vmatprep.subr.mxu0 0.0
        %1148 = vmatpush1.msra.mxu0 0.0
        %1149 = vmatprep.subr.mxu0 0.0
        %1150 = vmatpush1.msra.mxu0 0.0
        %1151 = vmatprep.subr.mxu0 0.0
        %1152 = vmatpush1.msra.mxu0 0.0
        %1153 = vmatprep.subr.mxu0 0.0
        %1154 = vmatpush1.msra.mxu0 0.0
        %1155 = vmatprep.subr.mxu0 0.0
        %1156 = vmatpush1.msra.mxu0 0.0
        %1157 = vmatprep.subr.mxu0 0.0
        %1158 = vmatpush1.msra.mxu0 0.0
        %1159 = vmatprep.subr.mxu0 0.0
        %1160 = vmatpush1.msra.mxu0 0.0
        %1161 = vmatprep.mubr.f32.mxu0 0.0
        %1162 = vmatmul.mubr.f32.gmra.mrb[0].mxu0 %v1074
        %v1163 = vpop.f32.mrb[0].mxu0
        %v1164 = vadd.f32 0.0, %v1163
        %v1165 = vpop.f32.mrb[0].mxu0
        %1166 = vmatprep.mubr.f32.mxu0 0.0
        %1167 = vmatmul.mubr.f32.gmra.mrb[0].mxu0 %v1077
        %v1168 = vpop.f32.mrb[0].mxu0
        %v1169 = vadd.f32 0.0, %v1168
        %v1170 = vpop.f32.mrb[0].mxu0
        %1171 = vmatprep.mubr.f32.mxu0 0.0
        %1172 = vmatmul.mubr.f32.gmra.mrb[0].mxu0 %v1080
        %v1173 = vpop.f32.mrb[0].mxu0
        %v1174 = vadd.f32 0.0, %v1173
        %v1175 = vpop.f32.mrb[0].mxu0
        %1176 = vmatprep.mubr.f32.mxu0 0.0
        %1177 = vmatmul.mubr.f32.gmra.mrb[0].mxu0 %v1083
        %v1178 = vpop.f32.mrb[0].mxu0
        %v1179 = vadd.f32 0.0, %v1178
        %v1180 = vpop.f32.mrb[0].mxu0
        %1181 = vmatprep.mubr.f32.mxu0 0.0
        %1182 = vmatmul.mubr.f32.gmra.mrb[0].mxu0 %v1086
        %v1183 = vpop.f32.mrb[0].mxu0
        %v1184 = vadd.f32 0.0, %v1183
        %v1185 = vpop.f32.mrb[0].mxu0
        %1186 = vmatprep.mubr.f32.mxu0 0.0
        %1187 = vmatmul.mubr.f32.gmra.mrb[0].mxu0 %v1089
        %v1188 = vpop.f32.mrb[0].mxu0
        %v1189 = vadd.f32 0.0, %v1188
        %v1190 = vpop.f32.mrb[0].mxu0
        %1191 = vmatprep.mubr.f32.mxu0 0.0
        %1192 = vmatmul.mubr.f32.gmra.mrb[0].mxu0 %v1092
        %v1193 = vpop.f32.mrb[0].mxu0
        %v1194 = vadd.f32 0.0, %v1193
        %v1195 = vpop.f32.mrb[0].mxu0
        %1196 = vmatprep.mubr.f32.mxu0 0.0
        %1197 = vmatmul.mubr.f32.gmra.mrb[0].mxu0 %v1095
        %v1198 = vpop.f32.mrb[0].mxu0
        %v1199 = vadd.f32 0.0, %v1198
        %v1200 = vpop.f32.mrb[0].mxu0
        %1201 = vdwg.mxu0
        %v1202 = vmul.f32 %v1164, %v1164
        %v1203 = vmul.f32 %v1169, %v1169
        %v1204 = vmul.f32 %v1174, %v1174
        %v1205 = vmul.f32 %v1179, %v1179
        %v1206 = vmul.f32 %v1184, %v1184
        %v1207 = vmul.f32 %v1189, %v1189
        %v1208 = vmul.f32 %v1194, %v1194
        %v1209 = vmul.f32 %v1199, %v1199
        %1218 = vrot.lane.b32.xlu0 %v1202, 1
        %v1219 = vpop.permute.xlu0 %1218
        %1220 = vrot.lane.b32.xlu0 %v1203, 1
        %v1221 = vpop.permute.xlu0 %1220
        %1222 = vrot.lane.b32.xlu0 %v1204, 1
        %v1223 = vpop.permute.xlu0 %1222
        %1224 = vrot.lane.b32.xlu0 %v1205, 1
        %v1225 = vpop.permute.xlu0 %1224
        %1226 = vrot.lane.b32.xlu0 %v1206, 1
        %v1227 = vpop.permute.xlu0 %1226
        %1228 = vrot.lane.b32.xlu0 %v1207, 1
        %v1229 = vpop.permute.xlu0 %1228
        %1230 = vrot.lane.b32.xlu0 %v1208, 1
        %v1231 = vpop.permute.xlu0 %1230
        %1232 = vrot.lane.b32.xlu0 %v1209, 1
        %v1233 = vpop.permute.xlu0 %1232
        %v1242 = vsub.f32 %v1164, %v1219
        %v1243 = vsub.f32 %v1169, %v1221
        %v1244 = vsub.f32 %v1174, %v1223
        %v1245 = vsub.f32 %v1179, %v1225
        %v1246 = vsub.f32 %v1184, %v1227
        %v1247 = vsub.f32 %v1189, %v1229
        %v1248 = vsub.f32 %v1194, %v1231
        %v1249 = vsub.f32 %v1199, %v1233
        %v1250 = vadd.f32 %v1242, 1e-05
        %v1251 = vadd.f32 %v1243, 1e-05
        %v1252 = vadd.f32 %v1244, 1e-05
        %v1253 = vadd.f32 %v1245, 1e-05
        %v1254 = vadd.f32 %v1246, 1e-05
        %v1255 = vadd.f32 %v1247, 1e-05
        %v1256 = vadd.f32 %v1248, 1e-05
        %v1257 = vadd.f32 %v1249, 1e-05
        %v1258 = vrsqrt.pop %v1250
        %v1259 = vrsqrt.pop %v1251
        %v1260 = vrsqrt.pop %v1252
        %v1261 = vrsqrt.pop %v1253
        %v1262 = vrsqrt.pop %v1254
        %v1263 = vrsqrt.pop %v1255
        %v1264 = vrsqrt.pop %v1256
        %v1265 = vrsqrt.pop %v1257
        %v1266 = vmul.f32 %v387, %v1258
        %v1267 = vmul.f32 %v388, %v1259
        %v1268 = vmul.f32 %v389, %v1260
        %v1269 = vmul.f32 %v390, %v1261
        %v1270 = vmul.f32 %v391, %v1262
        %v1271 = vmul.f32 %v392, %v1263
        %v1272 = vmul.f32 %v393, %v1264
        %v1273 = vmul.f32 %v394, %v1265
        %1282 = vrot.lane.b32.xlu0 %v1266, 127
        %v1283 = vpop.permute.xlu0 %1282
        %1284 = vrot.lane.b32.xlu0 %v1267, 127
        %v1285 = vpop.permute.xlu0 %1284
        %1286 = vrot.lane.b32.xlu0 %v1268, 127
        %v1287 = vpop.permute.xlu0 %1286
        %1288 = vrot.lane.b32.xlu0 %v1269, 127
        %v1289 = vpop.permute.xlu0 %1288
        %1290 = vrot.lane.b32.xlu0 %v1270, 127
        %v1291 = vpop.permute.xlu0 %1290
        %1292 = vrot.lane.b32.xlu0 %v1271, 127
        %v1293 = vpop.permute.xlu0 %1292
        %1294 = vrot.lane.b32.xlu0 %v1272, 127
        %v1295 = vpop.permute.xlu0 %1294
        %1296 = vrot.lane.b32.xlu0 %v1273, 127
        %v1297 = vpop.permute.xlu0 %1296
        %v1306 = vmul.f32 %v1164, %v1283
        %v1307 = vmul.f32 %v1169, %v1285
        %v1308 = vmul.f32 %v1174, %v1287
        %v1309 = vmul.f32 %v1179, %v1289
        %v1310 = vmul.f32 %v1184, %v1291
        %v1311 = vmul.f32 %v1189, %v1293
        %v1312 = vmul.f32 %v1194, %v1295
        %v1313 = vmul.f32 %v1199, %v1297
        %1322 = vrot.lane.b32.xlu0 %v1306, 2
        %v1323 = vpop.permute.xlu0 %1322
        %1324 = vrot.lane.b32.xlu0 %v1307, 2
        %v1325 = vpop.permute.xlu0 %1324
        %1326 = vrot.lane.b32.xlu0 %v1308, 2
        %v1327 = vpop.permute.xlu0 %1326
        %1328 = vrot.lane.b32.xlu0 %v1309, 2
        %v1329 = vpop.permute.xlu0 %1328
        %1330 = vrot.lane.b32.xlu0 %v1310, 2
        %v1331 = vpop.permute.xlu0 %1330
        %1332 = vrot.lane.b32.xlu0 %v1311, 2
        %v1333 = vpop.permute.xlu0 %1332
        %1334 = vrot.lane.b32.xlu0 %v1312, 2
        %v1335 = vpop.permute.xlu0 %1334
        %1336 = vrot.lane.b32.xlu0 %v1313, 2
        %v1337 = vpop.permute.xlu0 %1336
        %v1346 = vsub.f32 %v387, %v1323
        %v1347 = vsub.f32 %v388, %v1325
        %v1348 = vsub.f32 %v389, %v1327
        %v1349 = vsub.f32 %v390, %v1329
        %v1350 = vsub.f32 %v391, %v1331
        %v1351 = vsub.f32 %v392, %v1333
        %v1352 = vsub.f32 %v393, %v1335
        %v1353 = vsub.f32 %v394, %v1337
        %1354 = vset.pattern.permute.xlu0 1
        %1355 = vperm.xlu0 %1354, %v1266
        %v1356 = vpop.permute.xlu0 %1355
        %1358 = vset.pattern.permute.xlu0 1
        %1359 = vperm.xlu0 %1358, %v1267
        %v1360 = vpop.permute.xlu0 %1359
        %1362 = vset.pattern.permute.xlu0 1
        %1363 = vperm.xlu0 %1362, %v1268
        %v1364 = vpop.permute.xlu0 %1363
        %1366 = vset.pattern.permute.xlu0 1
        %1367 = vperm.xlu0 %1366, %v1269
        %v1368 = vpop.permute.xlu0 %1367
        %1370 = vset.pattern.permute.xlu0 1
        %1371 = vperm.xlu0 %1370, %v1270
        %v1372 = vpop.permute.xlu0 %1371
        %1374 = vset.pattern.permute.xlu0 1
        %1375 = vperm.xlu0 %1374, %v1271
        %v1376 = vpop.permute.xlu0 %1375
        %1378 = vset.pattern.permute.xlu0 1
        %1379 = vperm.xlu0 %1378, %v1272
        %v1380 = vpop.permute.xlu0 %1379
        %1382 = vset.pattern.permute.xlu0 1
        %1383 = vperm.xlu0 %1382, %v1273
        %v1384 = vpop.permute.xlu0 %1383
        %v1386 = vmul.f32 %v994, %v1356
        %v1387 = vmul.f32 %v997, %v1360
        %v1388 = vmul.f32 %v1002, %v1364
        %v1389 = vmul.f32 %v1005, %v1368
        %v1390 = vmul.f32 %v1010, %v1372
        %v1391 = vmul.f32 %v1013, %v1376
        %v1392 = vmul.f32 %v1018, %v1380
        %v1393 = vmul.f32 %v1021, %v1384
        %1395 = vset.pattern.permute.xlu0 2
        %1396 = vperm.xlu0 %1395, %v1346
        %v1397 = vpop.permute.xlu0 %1396
        %1400 = vset.pattern.permute.xlu0 2
        %1401 = vperm.xlu0 %1400, %v1347
        %v1402 = vpop.permute.xlu0 %1401
        %1405 = vset.pattern.permute.xlu0 2
        %1406 = vperm.xlu0 %1405, %v1348
        %v1407 = vpop.permute.xlu0 %1406
        %1410 = vset.pattern.permute.xlu0 2
        %1411 = vperm.xlu0 %1410, %v1349
        %v1412 = vpop.permute.xlu0 %1411
        %1415 = vset.pattern.permute.xlu0 2
        %1416 = vperm.xlu0 %1415, %v1350
        %v1417 = vpop.permute.xlu0 %1416
        %1420 = vset.pattern.permute.xlu0 2
        %1421 = vperm.xlu0 %1420, %v1351
        %v1422 = vpop.permute.xlu0 %1421
        %1425 = vset.pattern.permute.xlu0 2
        %1426 = vperm.xlu0 %1425, %v1352
        %v1427 = vpop.permute.xlu0 %1426
        %1430 = vset.pattern.permute.xlu0 2
        %1431 = vperm.xlu0 %1430, %v1353
        %v1432 = vpop.permute.xlu0 %1431
        %v1434 = vadd.f32 %v1386, %v1397
        %v1435 = vadd.f32 %v1387, %v1402
        %v1436 = vadd.f32 %v1388, %v1407
        %v1437 = vadd.f32 %v1389, %v1412
        %v1438 = vadd.f32 %v1390, %v1417
        %v1439 = vadd.f32 %v1391, %v1422
        %v1440 = vadd.f32 %v1392, %v1427
        %v1441 = vadd.f32 %v1393, %v1432
        %v1442 = vadd.f32 %v546, %v1434
        %v1443 = vadd.f32 %v549, %v1435
        %v1444 = vadd.f32 %v554, %v1436
        %v1445 = vadd.f32 %v557, %v1437
        %v1446 = vadd.f32 %v562, %v1438
        %v1447 = vadd.f32 %v565, %v1439
        %v1448 = vadd.f32 %v570, %v1440
        %v1449 = vadd.f32 %v573, %v1441
        %v1450 = vmax.f32 %v1442, 0.0
        %v1451 = vmax.f32 %v1443, 0.0
        %v1452 = vmax.f32 %v1444, 0.0
        %v1453 = vmax.f32 %v1445, 0.0
        %v1454 = vmax.f32 %v1446, 0.0
        %v1455 = vmax.f32 %v1447, 0.0
        %v1456 = vmax.f32 %v1448, 0.0
        %v1457 = vmax.f32 %v1449, 0.0
        %v1458 = vmul.f32 %v1450, %v847
        %v1459 = vmul.f32 %v1451, %v847
        %v1460 = vmul.f32 %v1452, %v847
        %v1461 = vmul.f32 %v1453, %v847
        %v1462 = vmul.f32 %v1454, %v847
        %v1463 = vmul.f32 %v1455, %v847
        %v1464 = vmul.f32 %v1456, %v847
        %v1465 = vmul.f32 %v1457, %v847
        %1466 = vst [vmem:[%s353] sm:$0xff] %v1458
        %1467 = vst [vmem:[%s353 + $0x8] sm:$0xff] %v1459
        %1468 = vst [vmem:[%s353 + $0x10] sm:$0xff] %v1460
        %1469 = vst [vmem:[%s353 + $0x18] sm:$0xff] %v1461
        %1470 = vst [vmem:[%s353 + $0x20] sm:$0xff] %v1462
        %1471 = vst [vmem:[%s353 + $0x28] sm:$0xff] %v1463
        %1472 = vst [vmem:[%s353 + $0x30] sm:$0xff] %v1464
        %1473 = vst [vmem:[%s353 + $0x38] sm:$0xff] %v1465
        %s1474 = sand.u32 %s210, 1
        %s1475 = scalar_lea.sflag [#allocation4], %s1474
        %s1476 = sand.u32 %s210, 1
        %s1477 = smul.addr %s1476, 64
        %s1478 = scalar_lea.vmem [#allocation8], %s1477
        // Predicated region
        $region65: #{tpu_custom_call.1} parent=51 // pred_check
          %p1479 = pneg %p220
        $region66: #{tpu_custom_call.1} parent=51 // pred_check_branch
          %1481 = sbr.rel (%p1479) target = $region68
        $region67: #{tpu_custom_call.1} parent=51 // pred_region
          %s1483 = ssub.s32 1024, 1024
          %1484 = vsyncadd %s1475, %s1483
          %s1485 = smul.addr %s24, 8
          %s1486 = smul.addr %s1485, 128
          %s1487 = scalar_lea.hbm %s8, %s1486
          %s1488 = sshll.u32 %s1478, 4
          %s1489 = int_to_ptr.vmem [resolvable:$true] %s1488
          %1494 = dma.vmem_to_hbm [thread:$0]  %s1489, 1024, %s1487, %s1475, 128, 128, 8
        $region68: #{tpu_custom_call.1} parent=51 // pred_fallthru
          _
      $region52: #{tpu_custom_call.1} parent=5 // pred_fallthru
        _
      %p1495 = scmp.le.s32.totalorder 2, %s19
      // Predicated region
      $region69: #{tpu_custom_call.1} parent=5 // pred_check
        %p1496 = pneg %p1495
      $region70: #{tpu_custom_call.1} parent=5 // pred_check_branch
        %1498 = sbr.rel (%p1496) target = $region72
      $region71: #{tpu_custom_call.1} parent=5 // pred_region
        %s1499 = ssub.s32 %s19, 2
        // Predicated region
        $region73: #{tpu_custom_call.1} parent=71 // pred_check
          %p1500 = pneg %p226
        $region74: #{tpu_custom_call.1} parent=71 // pred_check_branch
          %1502 = sbr.rel (%p1500) target = $region76
        $region75: #{tpu_custom_call.1} parent=71 // pred_region
          %s1503 = sand.u32 %s211, 1
          %s1504 = scalar_lea.sflag [#allocation4], %s1503
          %s1505 = sand.u32 %s211, 1
          %s1506 = smul.addr %s1505, 64
          %s1507 = scalar_lea.vmem [#allocation8], %s1506
          %1508 = dma.done %s1504, 1024
        $region76: #{tpu_custom_call.1} parent=71 // pred_fallthru
          _
      $region72: #{tpu_custom_call.1} parent=5 // pred_fallthru
        _
    $region6: #{tpu_custom_call.1} parent=1 // loop_footer
      %s23 = sadd.s32 1, %s19
    $region7: #{tpu_custom_call.1} parent=1 // loop_footer_branch
      %18 = sbr.rel target = $region3
    $region8: #{tpu_custom_call.1} parent=1 // loop_exit
      _
    %1509 = vsyncpa [#allocation3], 1
    %s1510 = scalar_lea.sflag [#allocation3], 1
    %1511 = vsyncpa %s1510, 1
    %1512 = vsyncpa [#allocation6], 1
    %1513 = vsyncpa [#allocation4], 1
    %s1514 = scalar_lea.sflag [#allocation4], 1
    %1515 = vsyncpa %s1514, 1

</llo_original>
